<compile_context>
chip_gen: v7x
topology: tpu7x:2x2x1
jax: 0.10.0
libtpu: 0.0.40
codegen_flags: <defaults>
</compile_context>

<pallas_src>
import jax
import jax.numpy as jnp
from jax import lax
from jax.experimental import pallas as pl
from jax.experimental.pallas import tpu as pltpu

# scaled-down module config (input_dim=150, features_dim=256 in the original)
HIDDEN = 32       # features_dim
NUM_LAYERS = 2    # two stacked LSTM layers, fused in one kernel


def lstm_encoder_kernel(x_ref, w1i_ref, b1_ref, wf_ref, b2_ref, out_ref, g1_ref):
    TB, D = x_ref.shape
    B, hid = out_ref.shape
    g4 = 4 * hid
    T = TB // B

    # Fused recurrent weight stays resident across all steps.
    wf = wf_ref[...]                                   # (2H, 8H) bf16
    # Hoist bias broadcast above the loop (JAX does not CSE broadcast_in_dim).
    b2b = jnp.broadcast_to(b2_ref[...], (B, g4))       # (B, 4H) f32

    # ---- layer-1 input projection hoisted out of the recurrence -------------
    # ONE dense bf16 MXU matmul + bias fold, stored flat (no reshape/relayout);
    # only the small fused recurrent matmul stays on the serial critical path.
    g1_ref[...] = (jnp.dot(x_ref[...], w1i_ref[...],
                           preferred_element_type=jnp.float32) + b1_ref[...])

    zeros = jnp.zeros((B, hid), jnp.float32)

    def gates_to_hc(gates, c):
        # PyTorch gate order i, f, g, o.  Single sigmoid (via tanh identity ->
        # one EUP op) + single tanh over the whole gate block, then static
        # lane slices.
        # TODO(synk): at production features_dim=256 the gate slices are
        # lane-aligned (multiples of 128); at H=32 they are sub-vreg selects.
        sg = 0.5 * jnp.tanh(0.5 * gates) + 0.5
        tg = jnp.tanh(gates)
        i = sg[:, 0 * hid:1 * hid]
        f = sg[:, 1 * hid:2 * hid]
        o = sg[:, 3 * hid:4 * hid]
        g = tg[:, 2 * hid:3 * hid]
        c_new = f * c + i * g
        h_new = o * jnp.tanh(c_new)
        return h_new, c_new

    def fused_step(g1_t, h1, c1, h2, c2):
        # ONE MXU matmul for BOTH skewed cells (they share h1[t-1] as input):
        #   lanes [0, 4H)  = h1 @ w1h               -> layer-1 recurrent, time t
        #   lanes [4H, 8H) = h1 @ w2i + h2 @ w2h    -> layer-2 gates,     time t-1
        lhs = jnp.concatenate([h1, h2], axis=-1).astype(wf.dtype)    # (B, 2H)
        rec = jnp.dot(lhs, wf, preferred_element_type=jnp.float32)   # (B, 8H)
        gates1 = g1_t + rec[:, :g4]
        gates2 = rec[:, g4:] + b2b
        # Stack both cells' gates along sublanes -> single EUP passes.
        gates = jnp.concatenate([gates1, gates2], axis=0)            # (2B, 4H)
        c_prev = jnp.concatenate([c1, c2], axis=0)                   # (2B, H)
        h_new, c_new = gates_to_hc(gates, c_prev)
        return h_new[:B], c_new[:B], h_new[B:], c_new[B:]

    # prologue: layer-1 step at t=0 (h = c = 0, so the recurrent matmul vanishes)
    h1, c1 = gates_to_hc(g1_ref[pl.ds(0, B), :], zeros)

    # Skewed (software-pipelined) recurrence: iteration t computes layer-1 at
    # time t AND layer-2 at time t-1, both off the single fused matmul.
    def body(t, carry):
        h1, c1, h2, c2 = carry
        g1_t = g1_ref[pl.ds(t * B, B), :]
        return fused_step(g1_t, h1, c1, h2, c2)

    h1, c1, h2, c2 = lax.fori_loop(1, T, body, (h1, c1, zeros, zeros),
                                   unroll=True)
    # epilogue: layer-2 step at time T-1 (the layer-1 half of the fused step is
    # fed zeros and discarded; sigmoid/tanh keep it bounded, so it is safe).
    _, _, h2, _ = fused_step(jnp.zeros((B, g4), jnp.float32), h1, c1, h2, c2)

    # features = mean over num_layers of the final hidden states -> (B, H)
    out_ref[...] = (h1 + h2) * 0.5


def lstm_encoder_forward(img, params):
    """img: (B, C, H, W) float32 NCHW -> features (B, HIDDEN)."""
    B, C, H, W = img.shape
    T, D = W, C * H
    hid = HIDDEN
    g4 = 4 * hid

    # util.img2seq: (B, C, H, W) -> (B, W, C*H); kernel consumes it flattened
    # time-major (T*B, D) so no in-kernel reshape/relayout is needed.
    # Cast to bf16 for the MXU (f32 accumulation inside the kernel).
    # TODO(synk): when more images are available, PACK the real batch to a
    # multiple of 8 rows here (do not zero-pad: at B=2 the stacked gate block is
    # already a single vreg, so zero-padding would only add EUP work).
    seq = jnp.transpose(img, (3, 0, 1, 2)).reshape(T * B, D).astype(jnp.bfloat16)

    w1i, w1h, b1, w2i, w2h, b2 = params
    # Fused block recurrent weight, built once outside the kernel:
    #   [[w1h, w2i],
    #    [  0 , w2h]]   -> (2H, 8H) bf16
    wf = jnp.concatenate(
        [jnp.concatenate([w1h, w2i], axis=1),
         jnp.concatenate([jnp.zeros((hid, g4), w2h.dtype), w2h], axis=1)],
        axis=0)

    # VMEM budget derived from actual buffer footprints (plus generous headroom
    # for compiler-internal scratch); well under every generation's limit.
    footprint = (seq.size * 2 + w1i.size * 2 + wf.size * 2
                 + b1.size * 4 + b2.size * 4
                 + B * hid * 4                # output
                 + T * B * g4 * 4)            # g1 scratch
    vmem_limit = int(max(4 * 1024 * 1024, 16 * footprint))

    out = pl.pallas_call(
        lstm_encoder_kernel,
        out_shape=jax.ShapeDtypeStruct((B, hid), jnp.float32),
        in_specs=[pl.BlockSpec(memory_space=pltpu.MemorySpace.VMEM)] * 5,
        out_specs=pl.BlockSpec(memory_space=pltpu.MemorySpace.VMEM),
        scratch_shapes=[pltpu.VMEM((T * B, g4), jnp.float32)],
        compiler_params=pltpu.CompilerParams(vmem_limit_bytes=vmem_limit),
        # TODO(synk): at production size (features_dim=256, long W, real batch)
        # tile the hoisted projection over time chunks (grid axis marked
        # "arbitrary" / emit_pipeline, bf16 g1) to fit v7x's 64 MiB VMEM, and add
        # a batch-parallel grid axis only on v7x (2 TensorCores).
    )(seq, w1i, b1, wf, b2)
    # .reshape(-1, features_dim) of the layer-mean is identity here: (B, H)
    return out


def init_params(key, input_dim, hidden):
    """PyTorch-style uniform(-1/sqrt(H), 1/sqrt(H)) init, deterministic."""
    k = 1.0 / jnp.sqrt(jnp.float32(hidden))
    keys = jax.random.split(key, 8)

    def u(kk, shape):
        return jax.random.uniform(kk, shape, jnp.float32, -k, k)

    # layer 1: W_ih (4H, D), W_hh (4H, H), b_ih (4H,), b_hh (4H,)
    w1_ih = u(keys[0], (4 * hidden, input_dim))
    w1_hh = u(keys[1], (4 * hidden, hidden))
    b1 = (u(keys[2], (4 * hidden,)) + u(keys[3], (4 * hidden,)))[None, :]
    # layer 2: input is hidden
    w2_ih = u(keys[4], (4 * hidden, hidden))
    w2_hh = u(keys[5], (4 * hidden, hidden))
    b2 = (u(keys[6], (4 * hidden,)) + u(keys[7], (4 * hidden,)))[None, :]

    # transpose so the kernel does x @ W; weights in bf16 (MXU-native), biases f32
    return (w1_ih.T.astype(jnp.bfloat16), w1_hh.T.astype(jnp.bfloat16), b1,
            w2_ih.T.astype(jnp.bfloat16), w2_hh.T.astype(jnp.bfloat16), b2)


def reference_forward(img, params):
    """Pure-JAX reference (lax.scan) with identical semantics and casts."""
    B, C, H, W = img.shape
    seq_tbd = jnp.transpose(img, (3, 0, 1, 2)).reshape(W, B, C * H).astype(jnp.bfloat16)
    w1i, w1h, b1, w2i, w2h, b2 = params

    def cell(x, h, c, wi, wh, b):
        gates = (jnp.dot(x.astype(wi.dtype), wi, preferred_element_type=jnp.float32)
                 + jnp.dot(h.astype(wh.dtype), wh, preferred_element_type=jnp.float32)
                 + b)
        i, f, g, o = jnp.split(gates, 4, axis=-1)
        c = jax.nn.sigmoid(f) * c + jax.nn.sigmoid(i) * jnp.tanh(g)
        h = jax.nn.sigmoid(o) * jnp.tanh(c)
        return h, c

    z = jnp.zeros((B, HIDDEN), jnp.float32)

    def step(carry, x_t):
        h1, c1, h2, c2 = carry
        h1, c1 = cell(x_t, h1, c1, w1i, w1h, b1)
        h2, c2 = cell(h1, h2, c2, w2i, w2h, b2)
        return (h1, c1, h2, c2), None

    (h1, _, h2, _), _ = lax.scan(step, (z, z, z, z), seq_tbd)
    return (h1 + h2) * 0.5


if __name__ == "__main__":
    key = jax.random.PRNGKey(0)
    k_img, k_par = jax.random.split(key)

    # small shapes: B=2, C=4, H=8, W=16 -> seq len T=16, input_dim D=C*H=32
    B, C, H, W = 2, 4, 8, 16
    img = jax.random.normal(k_img, (B, C, H, W), jnp.float32)
    params = init_params(k_par, input_dim=C * H, hidden=HIDDEN)

    out = jax.block_until_ready(lstm_encoder_forward(img, params))
    ref = jax.block_until_ready(reference_forward(img, params))
    assert out.shape == (B, HIDDEN)
    # bf16 weights/inputs with f32 accumulation on both paths -> loose-ish tol
    assert jnp.allclose(out, ref, atol=2e-3, rtol=2e-3), "mismatch vs JAX reference"

    print("KERNEL_OK")
</pallas_src>

<mosaic_0001>
module attributes {stable_mosaic.version = 11 : i64} {
  func.func @lstm_encoder_kernel(%arg0: memref<32x32xbf16, #tpu.memory_space<vmem>>, %arg1: memref<32x128xbf16, #tpu.memory_space<vmem>>, %arg2: memref<1x128xf32, #tpu.memory_space<vmem>>, %arg3: memref<64x256xbf16, #tpu.memory_space<vmem>>, %arg4: memref<1x128xf32, #tpu.memory_space<vmem>>, %arg5: memref<2x32xf32, #tpu.memory_space<vmem>>, %arg6: memref<32x128xf32, #tpu.memory_space<vmem>>) attributes {dimension_semantics = [], scalar_prefetch = 0 : i64, scratch_operands = 1 : i64, tpu.core_type = #tpu.core_type<tc>} {
    %c0 = arith.constant 0 : index
    %c0_0 = arith.constant 0 : index
    %0 = vector.load %arg3[%c0, %c0_0] : memref<64x256xbf16, #tpu.memory_space<vmem>>, vector<64x256xbf16>
    %c0_1 = arith.constant 0 : index
    %c0_2 = arith.constant 0 : index
    %1 = vector.load %arg4[%c0_1, %c0_2] : memref<1x128xf32, #tpu.memory_space<vmem>>, vector<1x128xf32>
    %2 = vector.shape_cast %1 : vector<1x128xf32> to vector<1x128xf32>
    %3 = vector.broadcast %2 : vector<1x128xf32> to vector<2x128xf32>
    %c0_3 = arith.constant 0 : index
    %c0_4 = arith.constant 0 : index
    %4 = vector.load %arg0[%c0_3, %c0_4] : memref<32x32xbf16, #tpu.memory_space<vmem>>, vector<32x32xbf16>
    %c0_5 = arith.constant 0 : index
    %c0_6 = arith.constant 0 : index
    %5 = vector.load %arg1[%c0_5, %c0_6] : memref<32x128xbf16, #tpu.memory_space<vmem>>, vector<32x128xbf16>
    %cst = arith.constant dense<0.000000e+00> : vector<32x128xf32>
    %6 = tpu.matmul %4, %5, %cst {dimension_numbers = #tpu.dot_dimension_numbers<[1], [0], [0], [1], [0, 0, 1, 1], [], []>} : vector<32x32xbf16>, vector<32x128xbf16>, vector<32x128xf32> -> vector<32x128xf32>
    %c0_7 = arith.constant 0 : index
    %c0_8 = arith.constant 0 : index
    %7 = vector.load %arg2[%c0_7, %c0_8] : memref<1x128xf32, #tpu.memory_space<vmem>>, vector<1x128xf32>
    %8 = vector.broadcast %7 : vector<1x128xf32> to vector<32x128xf32>
    %9 = arith.addf %6, %8 : vector<32x128xf32>
    %c0_9 = arith.constant 0 : index
    %c0_10 = arith.constant 0 : index
    %10 = vector.load %arg6[%c0_9, %c0_10] : memref<32x128xf32, #tpu.memory_space<vmem>>, vector<32x128xf32>
    tpu.vector_store %arg6[%c0_9, %c0_10], %9 {strides = array<i32>} : memref<32x128xf32, #tpu.memory_space<vmem>>, vector<32x128xf32>,
    %cst_11 = arith.constant 0.000000e+00 : f32
    %11 = vector.broadcast %cst_11 : f32 to vector<2x32xf32>
    %c0_12 = arith.constant 0 : index
    %c0_13 = arith.constant 0 : index
    %12 = vector.load %arg6[%c0_12, %c0_13] : memref<32x128xf32, #tpu.memory_space<vmem>>, vector<2x128xf32>
    %cst_14 = arith.constant 5.000000e-01 : f32
    %13 = vector.broadcast %cst_14 : f32 to vector<2x128xf32>
    %14 = arith.mulf %13, %12 : vector<2x128xf32>
    %15 = math.tanh %14 : vector<2x128xf32>
    %cst_15 = arith.constant 5.000000e-01 : f32
    %16 = vector.broadcast %cst_15 : f32 to vector<2x128xf32>
    %17 = arith.mulf %16, %15 : vector<2x128xf32>
    %cst_16 = arith.constant 5.000000e-01 : f32
    %18 = vector.broadcast %cst_16 : f32 to vector<2x128xf32>
    %19 = arith.addf %17, %18 : vector<2x128xf32>
    %20 = math.tanh %12 : vector<2x128xf32>
    %21 = vector.extract_strided_slice %19 {offsets = [0, 0], sizes = [2, 32], strides = [1, 1]} : vector<2x128xf32> to vector<2x32xf32>
    %22 = vector.extract_strided_slice %19 {offsets = [0, 32], sizes = [2, 32], strides = [1, 1]} : vector<2x128xf32> to vector<2x32xf32>
    %23 = vector.extract_strided_slice %19 {offsets = [0, 96], sizes = [2, 32], strides = [1, 1]} : vector<2x128xf32> to vector<2x32xf32>
    %24 = vector.extract_strided_slice %20 {offsets = [0, 64], sizes = [2, 32], strides = [1, 1]} : vector<2x128xf32> to vector<2x32xf32>
    %25 = arith.mulf %22, %11 : vector<2x32xf32>
    %26 = arith.mulf %21, %24 : vector<2x32xf32>
    %27 = arith.addf %25, %26 : vector<2x32xf32>
    %28 = math.tanh %27 : vector<2x32xf32>
    %29 = arith.mulf %23, %28 : vector<2x32xf32>
    %c1_i32 = arith.constant 1 : i32
    %c2_i32 = arith.constant 2 : i32
    %30 = arith.muli %c1_i32, %c2_i32 : i32
    %31 = arith.index_cast %30 : i32 to index
    %c0_17 = arith.constant 0 : index
    %32 = vector.load %arg6[%31, %c0_17] : memref<32x128xf32, #tpu.memory_space<vmem>>, vector<2x128xf32>
    %33 = tpu.concatenate %29, %11 in 1 : vector<2x32xf32>, vector<2x32xf32> -> vector<2x64xf32>
    %34 = arith.truncf %33 : vector<2x64xf32> to vector<2x64xbf16>
    %cst_18 = arith.constant dense<0.000000e+00> : vector<2x256xf32>
    %35 = tpu.matmul %34, %0, %cst_18 {dimension_numbers = #tpu.dot_dimension_numbers<[1], [0], [0], [1], [0, 0, 1, 1], [], []>} : vector<2x64xbf16>, vector<64x256xbf16>, vector<2x256xf32> -> vector<2x256xf32>
    %36 = vector.extract_strided_slice %35 {offsets = [0, 0], sizes = [2, 128], strides = [1, 1]} : vector<2x256xf32> to vector<2x128xf32>
    %37 = arith.addf %32, %36 : vector<2x128xf32>
    %38 = vector.extract_strided_slice %35 {offsets = [0, 128], sizes = [2, 128], strides = [1, 1]} : vector<2x256xf32> to vector<2x128xf32>
    %39 = arith.addf %38, %3 : vector<2x128xf32>
    %40 = tpu.concatenate %37, %39 in 0 : vector<2x128xf32>, vector<2x128xf32> -> vector<4x128xf32>
    %41 = tpu.concatenate %27, %11 in 0 : vector<2x32xf32>, vector<2x32xf32> -> vector<4x32xf32>
    %cst_19 = arith.constant 5.000000e-01 : f32
    %42 = vector.broadcast %cst_19 : f32 to vector<4x128xf32>
    %43 = arith.mulf %42, %40 : vector<4x128xf32>
    %44 = math.tanh %43 : vector<4x128xf32>
    %cst_20 = arith.constant 5.000000e-01 : f32
    %45 = vector.broadcast %cst_20 : f32 to vector<4x128xf32>
    %46 = arith.mulf %45, %44 : vector<4x128xf32>
    %cst_21 = arith.constant 5.000000e-01 : f32
    %47 = vector.broadcast %cst_21 : f32 to vector<4x128xf32>
    %48 = arith.addf %46, %47 : vector<4x128xf32>
    %49 = math.tanh %40 : vector<4x128xf32>
    %50 = vector.extract_strided_slice %48 {offsets = [0, 0], sizes = [4, 32], strides = [1, 1]} : vector<4x128xf32> to vector<4x32xf32>
    %51 = vector.extract_strided_slice %48 {offsets = [0, 32], sizes = [4, 32], strides = [1, 1]} : vector<4x128xf32> to vector<4x32xf32>
    %52 = vector.extract_strided_slice %48 {offsets = [0, 96], sizes = [4, 32], strides = [1, 1]} : vector<4x128xf32> to vector<4x32xf32>
    %53 = vector.extract_strided_slice %49 {offsets = [0, 64], sizes = [4, 32], strides = [1, 1]} : vector<4x128xf32> to vector<4x32xf32>
    %54 = arith.mulf %51, %41 : vector<4x32xf32>
    %55 = arith.mulf %50, %53 : vector<4x32xf32>
    %56 = arith.addf %54, %55 : vector<4x32xf32>
    %57 = math.tanh %56 : vector<4x32xf32>
    %58 = arith.mulf %52, %57 : vector<4x32xf32>
    %59 = vector.extract_strided_slice %58 {offsets = [0, 0], sizes = [2, 32], strides = [1, 1]} : vector<4x32xf32> to vector<2x32xf32>
    %60 = vector.extract_strided_slice %56 {offsets = [0, 0], sizes = [2, 32], strides = [1, 1]} : vector<4x32xf32> to vector<2x32xf32>
    %61 = vector.extract_strided_slice %58 {offsets = [2, 0], sizes = [2, 32], strides = [1, 1]} : vector<4x32xf32> to vector<2x32xf32>
    %62 = vector.extract_strided_slice %56 {offsets = [2, 0], sizes = [2, 32], strides = [1, 1]} : vector<4x32xf32> to vector<2x32xf32>
    %c2_i32_22 = arith.constant 2 : i32
    %c2_i32_23 = arith.constant 2 : i32
    %63 = arith.muli %c2_i32_22, %c2_i32_23 : i32
    %64 = arith.index_cast %63 : i32 to index
    %c0_24 = arith.constant 0 : index
    %65 = vector.load %arg6[%64, %c0_24] : memref<32x128xf32, #tpu.memory_space<vmem>>, vector<2x128xf32>
    %66 = tpu.concatenate %59, %61 in 1 : vector<2x32xf32>, vector<2x32xf32> -> vector<2x64xf32>
    %67 = arith.truncf %66 : vector<2x64xf32> to vector<2x64xbf16>
    %cst_25 = arith.constant dense<0.000000e+00> : vector<2x256xf32>
    %68 = tpu.matmul %67, %0, %cst_25 {dimension_numbers = #tpu.dot_dimension_numbers<[1], [0], [0], [1], [0, 0, 1, 1], [], []>} : vector<2x64xbf16>, vector<64x256xbf16>, vector<2x256xf32> -> vector<2x256xf32>
    %69 = vector.extract_strided_slice %68 {offsets = [0, 0], sizes = [2, 128], strides = [1, 1]} : vector<2x256xf32> to vector<2x128xf32>
    %70 = arith.addf %65, %69 : vector<2x128xf32>
    %71 = vector.extract_strided_slice %68 {offsets = [0, 128], sizes = [2, 128], strides = [1, 1]} : vector<2x256xf32> to vector<2x128xf32>
    %72 = arith.addf %71, %3 : vector<2x128xf32>
    %73 = tpu.concatenate %70, %72 in 0 : vector<2x128xf32>, vector<2x128xf32> -> vector<4x128xf32>
    %74 = tpu.concatenate %60, %62 in 0 : vector<2x32xf32>, vector<2x32xf32> -> vector<4x32xf32>
    %cst_26 = arith.constant 5.000000e-01 : f32
    %75 = vector.broadcast %cst_26 : f32 to vector<4x128xf32>
    %76 = arith.mulf %75, %73 : vector<4x128xf32>
    %77 = math.tanh %76 : vector<4x128xf32>
    %cst_27 = arith.constant 5.000000e-01 : f32
    %78 = vector.broadcast %cst_27 : f32 to vector<4x128xf32>
    %79 = arith.mulf %78, %77 : vector<4x128xf32>
    %cst_28 = arith.constant 5.000000e-01 : f32
    %80 = vector.broadcast %cst_28 : f32 to vector<4x128xf32>
    %81 = arith.addf %79, %80 : vector<4x128xf32>
    %82 = math.tanh %73 : vector<4x128xf32>
    %83 = vector.extract_strided_slice %81 {offsets = [0, 0], sizes = [4, 32], strides = [1, 1]} : vector<4x128xf32> to vector<4x32xf32>
    %84 = vector.extract_strided_slice %81 {offsets = [0, 32], sizes = [4, 32], strides = [1, 1]} : vector<4x128xf32> to vector<4x32xf32>
    %85 = vector.extract_strided_slice %81 {offsets = [0, 96], sizes = [4, 32], strides = [1, 1]} : vector<4x128xf32> to vector<4x32xf32>
    %86 = vector.extract_strided_slice %82 {offsets = [0, 64], sizes = [4, 32], strides = [1, 1]} : vector<4x128xf32> to vector<4x32xf32>
    %87 = arith.mulf %84, %74 : vector<4x32xf32>
    %88 = arith.mulf %83, %86 : vector<4x32xf32>
    %89 = arith.addf %87, %88 : vector<4x32xf32>
    %90 = math.tanh %89 : vector<4x32xf32>
    %91 = arith.mulf %85, %90 : vector<4x32xf32>
    %92 = vector.extract_strided_slice %91 {offsets = [0, 0], sizes = [2, 32], strides = [1, 1]} : vector<4x32xf32> to vector<2x32xf32>
    %93 = vector.extract_strided_slice %89 {offsets = [0, 0], sizes = [2, 32], strides = [1, 1]} : vector<4x32xf32> to vector<2x32xf32>
    %94 = vector.extract_strided_slice %91 {offsets = [2, 0], sizes = [2, 32], strides = [1, 1]} : vector<4x32xf32> to vector<2x32xf32>
    %95 = vector.extract_strided_slice %89 {offsets = [2, 0], sizes = [2, 32], strides = [1, 1]} : vector<4x32xf32> to vector<2x32xf32>
    %c3_i32 = arith.constant 3 : i32
    %c2_i32_29 = arith.constant 2 : i32
    %96 = arith.muli %c3_i32, %c2_i32_29 : i32
    %97 = arith.index_cast %96 : i32 to index
    %c0_30 = arith.constant 0 : index
    %98 = vector.load %arg6[%97, %c0_30] : memref<32x128xf32, #tpu.memory_space<vmem>>, vector<2x128xf32>
    %99 = tpu.concatenate %92, %94 in 1 : vector<2x32xf32>, vector<2x32xf32> -> vector<2x64xf32>
    %100 = arith.truncf %99 : vector<2x64xf32> to vector<2x64xbf16>
    %cst_31 = arith.constant dense<0.000000e+00> : vector<2x256xf32>
    %101 = tpu.matmul %100, %0, %cst_31 {dimension_numbers = #tpu.dot_dimension_numbers<[1], [0], [0], [1], [0, 0, 1, 1], [], []>} : vector<2x64xbf16>, vector<64x256xbf16>, vector<2x256xf32> -> vector<2x256xf32>
    %102 = vector.extract_strided_slice %101 {offsets = [0, 0], sizes = [2, 128], strides = [1, 1]} : vector<2x256xf32> to vector<2x128xf32>
    %103 = arith.addf %98, %102 : vector<2x128xf32>
    %104 = vector.extract_strided_slice %101 {offsets = [0, 128], sizes = [2, 128], strides = [1, 1]} : vector<2x256xf32> to vector<2x128xf32>
    %105 = arith.addf %104, %3 : vector<2x128xf32>
    %106 = tpu.concatenate %103, %105 in 0 : vector<2x128xf32>, vector<2x128xf32> -> vector<4x128xf32>
    %107 = tpu.concatenate %93, %95 in 0 : vector<2x32xf32>, vector<2x32xf32> -> vector<4x32xf32>
    %cst_32 = arith.constant 5.000000e-01 : f32
    %108 = vector.broadcast %cst_32 : f32 to vector<4x128xf32>
    %109 = arith.mulf %108, %106 : vector<4x128xf32>
    %110 = math.tanh %109 : vector<4x128xf32>
    %cst_33 = arith.constant 5.000000e-01 : f32
    %111 = vector.broadcast %cst_33 : f32 to vector<4x128xf32>
    %112 = arith.mulf %111, %110 : vector<4x128xf32>
    %cst_34 = arith.constant 5.000000e-01 : f32
    %113 = vector.broadcast %cst_34 : f32 to vector<4x128xf32>
    %114 = arith.addf %112, %113 : vector<4x128xf32>
    %115 = math.tanh %106 : vector<4x128xf32>
    %116 = vector.extract_strided_slice %114 {offsets = [0, 0], sizes = [4, 32], strides = [1, 1]} : vector<4x128xf32> to vector<4x32xf32>
    %117 = vector.extract_strided_slice %114 {offsets = [0, 32], sizes = [4, 32], strides = [1, 1]} : vector<4x128xf32> to vector<4x32xf32>
    %118 = vector.extract_strided_slice %114 {offsets = [0, 96], sizes = [4, 32], strides = [1, 1]} : vector<4x128xf32> to vector<4x32xf32>
    %119 = vector.extract_strided_slice %115 {offsets = [0, 64], sizes = [4, 32], strides = [1, 1]} : vector<4x128xf32> to vector<4x32xf32>
    %120 = arith.mulf %117, %107 : vector<4x32xf32>
    %121 = arith.mulf %116, %119 : vector<4x32xf32>
    %122 = arith.addf %120, %121 : vector<4x32xf32>
    %123 = math.tanh %122 : vector<4x32xf32>
    %124 = arith.mulf %118, %123 : vector<4x32xf32>
    %125 = vector.extract_strided_slice %124 {offsets = [0, 0], sizes = [2, 32], strides = [1, 1]} : vector<4x32xf32> to vector<2x32xf32>
    %126 = vector.extract_strided_slice %122 {offsets = [0, 0], sizes = [2, 32], strides = [1, 1]} : vector<4x32xf32> to vector<2x32xf32>
    %127 = vector.extract_strided_slice %124 {offsets = [2, 0], sizes = [2, 32], strides = [1, 1]} : vector<4x32xf32> to vector<2x32xf32>
    %128 = vector.extract_strided_slice %122 {offsets = [2, 0], sizes = [2, 32], strides = [1, 1]} : vector<4x32xf32> to vector<2x32xf32>
    %c4_i32 = arith.constant 4 : i32
    %c2_i32_35 = arith.constant 2 : i32
    %129 = arith.muli %c4_i32, %c2_i32_35 : i32
    %130 = arith.index_cast %129 : i32 to index
    %c0_36 = arith.constant 0 : index
    %131 = vector.load %arg6[%130, %c0_36] : memref<32x128xf32, #tpu.memory_space<vmem>>, vector<2x128xf32>
    %132 = tpu.concatenate %125, %127 in 1 : vector<2x32xf32>, vector<2x32xf32> -> vector<2x64xf32>
    %133 = arith.truncf %132 : vector<2x64xf32> to vector<2x64xbf16>
    %cst_37 = arith.constant dense<0.000000e+00> : vector<2x256xf32>
    %134 = tpu.matmul %133, %0, %cst_37 {dimension_numbers = #tpu.dot_dimension_numbers<[1], [0], [0], [1], [0, 0, 1, 1], [], []>} : vector<2x64xbf16>, vector<64x256xbf16>, vector<2x256xf32> -> vector<2x256xf32>
    %135 = vector.extract_strided_slice %134 {offsets = [0, 0], sizes = [2, 128], strides = [1, 1]} : vector<2x256xf32> to vector<2x128xf32>
    %136 = arith.addf %131, %135 : vector<2x128xf32>
    %137 = vector.extract_strided_slice %134 {offsets = [0, 128], sizes = [2, 128], strides = [1, 1]} : vector<2x256xf32> to vector<2x128xf32>
    %138 = arith.addf %137, %3 : vector<2x128xf32>
    %139 = tpu.concatenate %136, %138 in 0 : vector<2x128xf32>, vector<2x128xf32> -> vector<4x128xf32>
    %140 = tpu.concatenate %126, %128 in 0 : vector<2x32xf32>, vector<2x32xf32> -> vector<4x32xf32>
    %cst_38 = arith.constant 5.000000e-01 : f32
    %141 = vector.broadcast %cst_38 : f32 to vector<4x128xf32>
    %142 = arith.mulf %141, %139 : vector<4x128xf32>
    %143 = math.tanh %142 : vector<4x128xf32>
    %cst_39 = arith.constant 5.000000e-01 : f32
    %144 = vector.broadcast %cst_39 : f32 to vector<4x128xf32>
    %145 = arith.mulf %144, %143 : vector<4x128xf32>
    %cst_40 = arith.constant 5.000000e-01 : f32
    %146 = vector.broadcast %cst_40 : f32 to vector<4x128xf32>
    %147 = arith.addf %145, %146 : vector<4x128xf32>
    %148 = math.tanh %139 : vector<4x128xf32>
    %149 = vector.extract_strided_slice %147 {offsets = [0, 0], sizes = [4, 32], strides = [1, 1]} : vector<4x128xf32> to vector<4x32xf32>
    %150 = vector.extract_strided_slice %147 {offsets = [0, 32], sizes = [4, 32], strides = [1, 1]} : vector<4x128xf32> to vector<4x32xf32>
    %151 = vector.extract_strided_slice %147 {offsets = [0, 96], sizes = [4, 32], strides = [1, 1]} : vector<4x128xf32> to vector<4x32xf32>
    %152 = vector.extract_strided_slice %148 {offsets = [0, 64], sizes = [4, 32], strides = [1, 1]} : vector<4x128xf32> to vector<4x32xf32>
    %153 = arith.mulf %150, %140 : vector<4x32xf32>
    %154 = arith.mulf %149, %152 : vector<4x32xf32>
    %155 = arith.addf %153, %154 : vector<4x32xf32>
    %156 = math.tanh %155 : vector<4x32xf32>
    %157 = arith.mulf %151, %156 : vector<4x32xf32>
    %158 = vector.extract_strided_slice %157 {offsets = [0, 0], sizes = [2, 32], strides = [1, 1]} : vector<4x32xf32> to vector<2x32xf32>
    %159 = vector.extract_strided_slice %155 {offsets = [0, 0], sizes = [2, 32], strides = [1, 1]} : vector<4x32xf32> to vector<2x32xf32>
    %160 = vector.extract_strided_slice %157 {offsets = [2, 0], sizes = [2, 32], strides = [1, 1]} : vector<4x32xf32> to vector<2x32xf32>
    %161 = vector.extract_strided_slice %155 {offsets = [2, 0], sizes = [2, 32], strides = [1, 1]} : vector<4x32xf32> to vector<2x32xf32>
    %c5_i32 = arith.constant 5 : i32
    %c2_i32_41 = arith.constant 2 : i32
    %162 = arith.muli %c5_i32, %c2_i32_41 : i32
    %163 = arith.index_cast %162 : i32 to index
    %c0_42 = arith.constant 0 : index
    %164 = vector.load %arg6[%163, %c0_42] : memref<32x128xf32, #tpu.memory_space<vmem>>, vector<2x128xf32>
    %165 = tpu.concatenate %158, %160 in 1 : vector<2x32xf32>, vector<2x32xf32> -> vector<2x64xf32>
    %166 = arith.truncf %165 : vector<2x64xf32> to vector<2x64xbf16>
    %cst_43 = arith.constant dense<0.000000e+00> : vector<2x256xf32>
    %167 = tpu.matmul %166, %0, %cst_43 {dimension_numbers = #tpu.dot_dimension_numbers<[1], [0], [0], [1], [0, 0, 1, 1], [], []>} : vector<2x64xbf16>, vector<64x256xbf16>, vector<2x256xf32> -> vector<2x256xf32>
    %168 = vector.extract_strided_slice %167 {offsets = [0, 0], sizes = [2, 128], strides = [1, 1]} : vector<2x256xf32> to vector<2x128xf32>
    %169 = arith.addf %164, %168 : vector<2x128xf32>
    %170 = vector.extract_strided_slice %167 {offsets = [0, 128], sizes = [2, 128], strides = [1, 1]} : vector<2x256xf32> to vector<2x128xf32>
    %171 = arith.addf %170, %3 : vector<2x128xf32>
    %172 = tpu.concatenate %169, %171 in 0 : vector<2x128xf32>, vector<2x128xf32> -> vector<4x128xf32>
    %173 = tpu.concatenate %159, %161 in 0 : vector<2x32xf32>, vector<2x32xf32> -> vector<4x32xf32>
    %cst_44 = arith.constant 5.000000e-01 : f32
    %174 = vector.broadcast %cst_44 : f32 to vector<4x128xf32>
    %175 = arith.mulf %174, %172 : vector<4x128xf32>
    %176 = math.tanh %175 : vector<4x128xf32>
    %cst_45 = arith.constant 5.000000e-01 : f32
    %177 = vector.broadcast %cst_45 : f32 to vector<4x128xf32>
    %178 = arith.mulf %177, %176 : vector<4x128xf32>
    %cst_46 = arith.constant 5.000000e-01 : f32
    %179 = vector.broadcast %cst_46 : f32 to vector<4x128xf32>
    %180 = arith.addf %178, %179 : vector<4x128xf32>
    %181 = math.tanh %172 : vector<4x128xf32>
    %182 = vector.extract_strided_slice %180 {offsets = [0, 0], sizes = [4, 32], strides = [1, 1]} : vector<4x128xf32> to vector<4x32xf32>
    %183 = vector.extract_strided_slice %180 {offsets = [0, 32], sizes = [4, 32], strides = [1, 1]} : vector<4x128xf32> to vector<4x32xf32>
    %184 = vector.extract_strided_slice %180 {offsets = [0, 96], sizes = [4, 32], strides = [1, 1]} : vector<4x128xf32> to vector<4x32xf32>
    %185 = vector.extract_strided_slice %181 {offsets = [0, 64], sizes = [4, 32], strides = [1, 1]} : vector<4x128xf32> to vector<4x32xf32>
    %186 = arith.mulf %183, %173 : vector<4x32xf32>
    %187 = arith.mulf %182, %185 : vector<4x32xf32>
    %188 = arith.addf %186, %187 : vector<4x32xf32>
    %189 = math.tanh %188 : vector<4x32xf32>
    %190 = arith.mulf %184, %189 : vector<4x32xf32>
    %191 = vector.extract_strided_slice %190 {offsets = [0, 0], sizes = [2, 32], strides = [1, 1]} : vector<4x32xf32> to vector<2x32xf32>
    %192 = vector.extract_strided_slice %188 {offsets = [0, 0], sizes = [2, 32], strides = [1, 1]} : vector<4x32xf32> to vector<2x32xf32>
    %193 = vector.extract_strided_slice %190 {offsets = [2, 0], sizes = [2, 32], strides = [1, 1]} : vector<4x32xf32> to vector<2x32xf32>
    %194 = vector.extract_strided_slice %188 {offsets = [2, 0], sizes = [2, 32], strides = [1, 1]} : vector<4x32xf32> to vector<2x32xf32>
    %c6_i32 = arith.constant 6 : i32
    %c2_i32_47 = arith.constant 2 : i32
    %195 = arith.muli %c6_i32, %c2_i32_47 : i32
    %196 = arith.index_cast %195 : i32 to index
    %c0_48 = arith.constant 0 : index
    %197 = vector.load %arg6[%196, %c0_48] : memref<32x128xf32, #tpu.memory_space<vmem>>, vector<2x128xf32>
    %198 = tpu.concatenate %191, %193 in 1 : vector<2x32xf32>, vector<2x32xf32> -> vector<2x64xf32>
    %199 = arith.truncf %198 : vector<2x64xf32> to vector<2x64xbf16>
    %cst_49 = arith.constant dense<0.000000e+00> : vector<2x256xf32>
    %200 = tpu.matmul %199, %0, %cst_49 {dimension_numbers = #tpu.dot_dimension_numbers<[1], [0], [0], [1], [0, 0, 1, 1], [], []>} : vector<2x64xbf16>, vector<64x256xbf16>, vector<2x256xf32> -> vector<2x256xf32>
    %201 = vector.extract_strided_slice %200 {offsets = [0, 0], sizes = [2, 128], strides = [1, 1]} : vector<2x256xf32> to vector<2x128xf32>
    %202 = arith.addf %197, %201 : vector<2x128xf32>
    %203 = vector.extract_strided_slice %200 {offsets = [0, 128], sizes = [2, 128], strides = [1, 1]} : vector<2x256xf32> to vector<2x128xf32>
    %204 = arith.addf %203, %3 : vector<2x128xf32>
    %205 = tpu.concatenate %202, %204 in 0 : vector<2x128xf32>, vector<2x128xf32> -> vector<4x128xf32>
    %206 = tpu.concatenate %192, %194 in 0 : vector<2x32xf32>, vector<2x32xf32> -> vector<4x32xf32>
    %cst_50 = arith.constant 5.000000e-01 : f32
    %207 = vector.broadcast %cst_50 : f32 to vector<4x128xf32>
    %208 = arith.mulf %207, %205 : vector<4x128xf32>
    %209 = math.tanh %208 : vector<4x128xf32>
    %cst_51 = arith.constant 5.000000e-01 : f32
    %210 = vector.broadcast %cst_51 : f32 to vector<4x128xf32>
    %211 = arith.mulf %210, %209 : vector<4x128xf32>
    %cst_52 = arith.constant 5.000000e-01 : f32
    %212 = vector.broadcast %cst_52 : f32 to vector<4x128xf32>
    %213 = arith.addf %211, %212 : vector<4x128xf32>
    %214 = math.tanh %205 : vector<4x128xf32>
    %215 = vector.extract_strided_slice %213 {offsets = [0, 0], sizes = [4, 32], strides = [1, 1]} : vector<4x128xf32> to vector<4x32xf32>
    %216 = vector.extract_strided_slice %213 {offsets = [0, 32], sizes = [4, 32], strides = [1, 1]} : vector<4x128xf32> to vector<4x32xf32>
    %217 = vector.extract_strided_slice %213 {offsets = [0, 96], sizes = [4, 32], strides = [1, 1]} : vector<4x128xf32> to vector<4x32xf32>
    %218 = vector.extract_strided_slice %214 {offsets = [0, 64], sizes = [4, 32], strides = [1, 1]} : vector<4x128xf32> to vector<4x32xf32>
    %219 = arith.mulf %216, %206 : vector<4x32xf32>
    %220 = arith.mulf %215, %218 : vector<4x32xf32>
    %221 = arith.addf %219, %220 : vector<4x32xf32>
    %222 = math.tanh %221 : vector<4x32xf32>
    %223 = arith.mulf %217, %222 : vector<4x32xf32>
    %224 = vector.extract_strided_slice %223 {offsets = [0, 0], sizes = [2, 32], strides = [1, 1]} : vector<4x32xf32> to vector<2x32xf32>
    %225 = vector.extract_strided_slice %221 {offsets = [0, 0], sizes = [2, 32], strides = [1, 1]} : vector<4x32xf32> to vector<2x32xf32>
    %226 = vector.extract_strided_slice %223 {offsets = [2, 0], sizes = [2, 32], strides = [1, 1]} : vector<4x32xf32> to vector<2x32xf32>
    %227 = vector.extract_strided_slice %221 {offsets = [2, 0], sizes = [2, 32], strides = [1, 1]} : vector<4x32xf32> to vector<2x32xf32>
    %c7_i32 = arith.constant 7 : i32
    %c2_i32_53 = arith.constant 2 : i32
    %228 = arith.muli %c7_i32, %c2_i32_53 : i32
    %229 = arith.index_cast %228 : i32 to index
    %c0_54 = arith.constant 0 : index
    %230 = vector.load %arg6[%229, %c0_54] : memref<32x128xf32, #tpu.memory_space<vmem>>, vector<2x128xf32>
    %231 = tpu.concatenate %224, %226 in 1 : vector<2x32xf32>, vector<2x32xf32> -> vector<2x64xf32>
    %232 = arith.truncf %231 : vector<2x64xf32> to vector<2x64xbf16>
    %cst_55 = arith.constant dense<0.000000e+00> : vector<2x256xf32>
    %233 = tpu.matmul %232, %0, %cst_55 {dimension_numbers = #tpu.dot_dimension_numbers<[1], [0], [0], [1], [0, 0, 1, 1], [], []>} : vector<2x64xbf16>, vector<64x256xbf16>, vector<2x256xf32> -> vector<2x256xf32>
    %234 = vector.extract_strided_slice %233 {offsets = [0, 0], sizes = [2, 128], strides = [1, 1]} : vector<2x256xf32> to vector<2x128xf32>
    %235 = arith.addf %230, %234 : vector<2x128xf32>
    %236 = vector.extract_strided_slice %233 {offsets = [0, 128], sizes = [2, 128], strides = [1, 1]} : vector<2x256xf32> to vector<2x128xf32>
    %237 = arith.addf %236, %3 : vector<2x128xf32>
    %238 = tpu.concatenate %235, %237 in 0 : vector<2x128xf32>, vector<2x128xf32> -> vector<4x128xf32>
    %239 = tpu.concatenate %225, %227 in 0 : vector<2x32xf32>, vector<2x32xf32> -> vector<4x32xf32>
    %cst_56 = arith.constant 5.000000e-01 : f32
    %240 = vector.broadcast %cst_56 : f32 to vector<4x128xf32>
    %241 = arith.mulf %240, %238 : vector<4x128xf32>
    %242 = math.tanh %241 : vector<4x128xf32>
    %cst_57 = arith.constant 5.000000e-01 : f32
    %243 = vector.broadcast %cst_57 : f32 to vector<4x128xf32>
    %244 = arith.mulf %243, %242 : vector<4x128xf32>
    %cst_58 = arith.constant 5.000000e-01 : f32
    %245 = vector.broadcast %cst_58 : f32 to vector<4x128xf32>
    %246 = arith.addf %244, %245 : vector<4x128xf32>
    %247 = math.tanh %238 : vector<4x128xf32>
    %248 = vector.extract_strided_slice %246 {offsets = [0, 0], sizes = [4, 32], strides = [1, 1]} : vector<4x128xf32> to vector<4x32xf32>
    %249 = vector.extract_strided_slice %246 {offsets = [0, 32], sizes = [4, 32], strides = [1, 1]} : vector<4x128xf32> to vector<4x32xf32>
    %250 = vector.extract_strided_slice %246 {offsets = [0, 96], sizes = [4, 32], strides = [1, 1]} : vector<4x128xf32> to vector<4x32xf32>
    %251 = vector.extract_strided_slice %247 {offsets = [0, 64], sizes = [4, 32], strides = [1, 1]} : vector<4x128xf32> to vector<4x32xf32>
    %252 = arith.mulf %249, %239 : vector<4x32xf32>
    %253 = arith.mulf %248, %251 : vector<4x32xf32>
    %254 = arith.addf %252, %253 : vector<4x32xf32>
    %255 = math.tanh %254 : vector<4x32xf32>
    %256 = arith.mulf %250, %255 : vector<4x32xf32>
    %257 = vector.extract_strided_slice %256 {offsets = [0, 0], sizes = [2, 32], strides = [1, 1]} : vector<4x32xf32> to vector<2x32xf32>
    %258 = vector.extract_strided_slice %254 {offsets = [0, 0], sizes = [2, 32], strides = [1, 1]} : vector<4x32xf32> to vector<2x32xf32>
    %259 = vector.extract_strided_slice %256 {offsets = [2, 0], sizes = [2, 32], strides = [1, 1]} : vector<4x32xf32> to vector<2x32xf32>
    %260 = vector.extract_strided_slice %254 {offsets = [2, 0], sizes = [2, 32], strides = [1, 1]} : vector<4x32xf32> to vector<2x32xf32>
    %c8_i32 = arith.constant 8 : i32
    %c2_i32_59 = arith.constant 2 : i32
    %261 = arith.muli %c8_i32, %c2_i32_59 : i32
    %262 = arith.index_cast %261 : i32 to index
    %c0_60 = arith.constant 0 : index
    %263 = vector.load %arg6[%262, %c0_60] : memref<32x128xf32, #tpu.memory_space<vmem>>, vector<2x128xf32>
    %264 = tpu.concatenate %257, %259 in 1 : vector<2x32xf32>, vector<2x32xf32> -> vector<2x64xf32>
    %265 = arith.truncf %264 : vector<2x64xf32> to vector<2x64xbf16>
    %cst_61 = arith.constant dense<0.000000e+00> : vector<2x256xf32>
    %266 = tpu.matmul %265, %0, %cst_61 {dimension_numbers = #tpu.dot_dimension_numbers<[1], [0], [0], [1], [0, 0, 1, 1], [], []>} : vector<2x64xbf16>, vector<64x256xbf16>, vector<2x256xf32> -> vector<2x256xf32>
    %267 = vector.extract_strided_slice %266 {offsets = [0, 0], sizes = [2, 128], strides = [1, 1]} : vector<2x256xf32> to vector<2x128xf32>
    %268 = arith.addf %263, %267 : vector<2x128xf32>
    %269 = vector.extract_strided_slice %266 {offsets = [0, 128], sizes = [2, 128], strides = [1, 1]} : vector<2x256xf32> to vector<2x128xf32>
    %270 = arith.addf %269, %3 : vector<2x128xf32>
    %271 = tpu.concatenate %268, %270 in 0 : vector<2x128xf32>, vector<2x128xf32> -> vector<4x128xf32>
    %272 = tpu.concatenate %258, %260 in 0 : vector<2x32xf32>, vector<2x32xf32> -> vector<4x32xf32>
    %cst_62 = arith.constant 5.000000e-01 : f32
    %273 = vector.broadcast %cst_62 : f32 to vector<4x128xf32>
    %274 = arith.mulf %273, %271 : vector<4x128xf32>
    %275 = math.tanh %274 : vector<4x128xf32>
    %cst_63 = arith.constant 5.000000e-01 : f32
    %276 = vector.broadcast %cst_63 : f32 to vector<4x128xf32>
    %277 = arith.mulf %276, %275 : vector<4x128xf32>
    %cst_64 = arith.constant 5.000000e-01 : f32
    %278 = vector.broadcast %cst_64 : f32 to vector<4x128xf32>
    %279 = arith.addf %277, %278 : vector<4x128xf32>
    %280 = math.tanh %271 : vector<4x128xf32>
    %281 = vector.extract_strided_slice %279 {offsets = [0, 0], sizes = [4, 32], strides = [1, 1]} : vector<4x128xf32> to vector<4x32xf32>
    %282 = vector.extract_strided_slice %279 {offsets = [0, 32], sizes = [4, 32], strides = [1, 1]} : vector<4x128xf32> to vector<4x32xf32>
    %283 = vector.extract_strided_slice %279 {offsets = [0, 96], sizes = [4, 32], strides = [1, 1]} : vector<4x128xf32> to vector<4x32xf32>
    %284 = vector.extract_strided_slice %280 {offsets = [0, 64], sizes = [4, 32], strides = [1, 1]} : vector<4x128xf32> to vector<4x32xf32>
    %285 = arith.mulf %282, %272 : vector<4x32xf32>
    %286 = arith.mulf %281, %284 : vector<4x32xf32>
    %287 = arith.addf %285, %286 : vector<4x32xf32>
    %288 = math.tanh %287 : vector<4x32xf32>
    %289 = arith.mulf %283, %288 : vector<4x32xf32>
    %290 = vector.extract_strided_slice %289 {offsets = [0, 0], sizes = [2, 32], strides = [1, 1]} : vector<4x32xf32> to vector<2x32xf32>
    %291 = vector.extract_strided_slice %287 {offsets = [0, 0], sizes = [2, 32], strides = [1, 1]} : vector<4x32xf32> to vector<2x32xf32>
    %292 = vector.extract_strided_slice %289 {offsets = [2, 0], sizes = [2, 32], strides = [1, 1]} : vector<4x32xf32> to vector<2x32xf32>
    %293 = vector.extract_strided_slice %287 {offsets = [2, 0], sizes = [2, 32], strides = [1, 1]} : vector<4x32xf32> to vector<2x32xf32>
    %c9_i32 = arith.constant 9 : i32
    %c2_i32_65 = arith.constant 2 : i32
    %294 = arith.muli %c9_i32, %c2_i32_65 : i32
    %295 = arith.index_cast %294 : i32 to index
    %c0_66 = arith.constant 0 : index
    %296 = vector.load %arg6[%295, %c0_66] : memref<32x128xf32, #tpu.memory_space<vmem>>, vector<2x128xf32>
    %297 = tpu.concatenate %290, %292 in 1 : vector<2x32xf32>, vector<2x32xf32> -> vector<2x64xf32>
    %298 = arith.truncf %297 : vector<2x64xf32> to vector<2x64xbf16>
    %cst_67 = arith.constant dense<0.000000e+00> : vector<2x256xf32>
    %299 = tpu.matmul %298, %0, %cst_67 {dimension_numbers = #tpu.dot_dimension_numbers<[1], [0], [0], [1], [0, 0, 1, 1], [], []>} : vector<2x64xbf16>, vector<64x256xbf16>, vector<2x256xf32> -> vector<2x256xf32>
    %300 = vector.extract_strided_slice %299 {offsets = [0, 0], sizes = [2, 128], strides = [1, 1]} : vector<2x256xf32> to vector<2x128xf32>
    %301 = arith.addf %296, %300 : vector<2x128xf32>
    %302 = vector.extract_strided_slice %299 {offsets = [0, 128], sizes = [2, 128], strides = [1, 1]} : vector<2x256xf32> to vector<2x128xf32>
    %303 = arith.addf %302, %3 : vector<2x128xf32>
    %304 = tpu.concatenate %301, %303 in 0 : vector<2x128xf32>, vector<2x128xf32> -> vector<4x128xf32>
    %305 = tpu.concatenate %291, %293 in 0 : vector<2x32xf32>, vector<2x32xf32> -> vector<4x32xf32>
    %cst_68 = arith.constant 5.000000e-01 : f32
    %306 = vector.broadcast %cst_68 : f32 to vector<4x128xf32>
    %307 = arith.mulf %306, %304 : vector<4x128xf32>
    %308 = math.tanh %307 : vector<4x128xf32>
    %cst_69 = arith.constant 5.000000e-01 : f32
    %309 = vector.broadcast %cst_69 : f32 to vector<4x128xf32>
    %310 = arith.mulf %309, %308 : vector<4x128xf32>
    %cst_70 = arith.constant 5.000000e-01 : f32
    %311 = vector.broadcast %cst_70 : f32 to vector<4x128xf32>
    %312 = arith.addf %310, %311 : vector<4x128xf32>
    %313 = math.tanh %304 : vector<4x128xf32>
    %314 = vector.extract_strided_slice %312 {offsets = [0, 0], sizes = [4, 32], strides = [1, 1]} : vector<4x128xf32> to vector<4x32xf32>
    %315 = vector.extract_strided_slice %312 {offsets = [0, 32], sizes = [4, 32], strides = [1, 1]} : vector<4x128xf32> to vector<4x32xf32>
    %316 = vector.extract_strided_slice %312 {offsets = [0, 96], sizes = [4, 32], strides = [1, 1]} : vector<4x128xf32> to vector<4x32xf32>
    %317 = vector.extract_strided_slice %313 {offsets = [0, 64], sizes = [4, 32], strides = [1, 1]} : vector<4x128xf32> to vector<4x32xf32>
    %318 = arith.mulf %315, %305 : vector<4x32xf32>
    %319 = arith.mulf %314, %317 : vector<4x32xf32>
    %320 = arith.addf %318, %319 : vector<4x32xf32>
    %321 = math.tanh %320 : vector<4x32xf32>
    %322 = arith.mulf %316, %321 : vector<4x32xf32>
    %323 = vector.extract_strided_slice %322 {offsets = [0, 0], sizes = [2, 32], strides = [1, 1]} : vector<4x32xf32> to vector<2x32xf32>
    %324 = vector.extract_strided_slice %320 {offsets = [0, 0], sizes = [2, 32], strides = [1, 1]} : vector<4x32xf32> to vector<2x32xf32>
    %325 = vector.extract_strided_slice %322 {offsets = [2, 0], sizes = [2, 32], strides = [1, 1]} : vector<4x32xf32> to vector<2x32xf32>
    %326 = vector.extract_strided_slice %320 {offsets = [2, 0], sizes = [2, 32], strides = [1, 1]} : vector<4x32xf32> to vector<2x32xf32>
    %c10_i32 = arith.constant 10 : i32
    %c2_i32_71 = arith.constant 2 : i32
    %327 = arith.muli %c10_i32, %c2_i32_71 : i32
    %328 = arith.index_cast %327 : i32 to index
    %c0_72 = arith.constant 0 : index
    %329 = vector.load %arg6[%328, %c0_72] : memref<32x128xf32, #tpu.memory_space<vmem>>, vector<2x128xf32>
    %330 = tpu.concatenate %323, %325 in 1 : vector<2x32xf32>, vector<2x32xf32> -> vector<2x64xf32>
    %331 = arith.truncf %330 : vector<2x64xf32> to vector<2x64xbf16>
    %cst_73 = arith.constant dense<0.000000e+00> : vector<2x256xf32>
    %332 = tpu.matmul %331, %0, %cst_73 {dimension_numbers = #tpu.dot_dimension_numbers<[1], [0], [0], [1], [0, 0, 1, 1], [], []>} : vector<2x64xbf16>, vector<64x256xbf16>, vector<2x256xf32> -> vector<2x256xf32>
    %333 = vector.extract_strided_slice %332 {offsets = [0, 0], sizes = [2, 128], strides = [1, 1]} : vector<2x256xf32> to vector<2x128xf32>
    %334 = arith.addf %329, %333 : vector<2x128xf32>
    %335 = vector.extract_strided_slice %332 {offsets = [0, 128], sizes = [2, 128], strides = [1, 1]} : vector<2x256xf32> to vector<2x128xf32>
    %336 = arith.addf %335, %3 : vector<2x128xf32>
    %337 = tpu.concatenate %334, %336 in 0 : vector<2x128xf32>, vector<2x128xf32> -> vector<4x128xf32>
    %338 = tpu.concatenate %324, %326 in 0 : vector<2x32xf32>, vector<2x32xf32> -> vector<4x32xf32>
    %cst_74 = arith.constant 5.000000e-01 : f32
    %339 = vector.broadcast %cst_74 : f32 to vector<4x128xf32>
    %340 = arith.mulf %339, %337 : vector<4x128xf32>
    %341 = math.tanh %340 : vector<4x128xf32>
    %cst_75 = arith.constant 5.000000e-01 : f32
    %342 = vector.broadcast %cst_75 : f32 to vector<4x128xf32>
    %343 = arith.mulf %342, %341 : vector<4x128xf32>
    %cst_76 = arith.constant 5.000000e-01 : f32
    %344 = vector.broadcast %cst_76 : f32 to vector<4x128xf32>
    %345 = arith.addf %343, %344 : vector<4x128xf32>
    %346 = math.tanh %337 : vector<4x128xf32>
    %347 = vector.extract_strided_slice %345 {offsets = [0, 0], sizes = [4, 32], strides = [1, 1]} : vector<4x128xf32> to vector<4x32xf32>
    %348 = vector.extract_strided_slice %345 {offsets = [0, 32], sizes = [4, 32], strides = [1, 1]} : vector<4x128xf32> to vector<4x32xf32>
    %349 = vector.extract_strided_slice %345 {offsets = [0, 96], sizes = [4, 32], strides = [1, 1]} : vector<4x128xf32> to vector<4x32xf32>
    %350 = vector.extract_strided_slice %346 {offsets = [0, 64], sizes = [4, 32], strides = [1, 1]} : vector<4x128xf32> to vector<4x32xf32>
    %351 = arith.mulf %348, %338 : vector<4x32xf32>
    %352 = arith.mulf %347, %350 : vector<4x32xf32>
    %353 = arith.addf %351, %352 : vector<4x32xf32>
    %354 = math.tanh %353 : vector<4x32xf32>
    %355 = arith.mulf %349, %354 : vector<4x32xf32>
    %356 = vector.extract_strided_slice %355 {offsets = [0, 0], sizes = [2, 32], strides = [1, 1]} : vector<4x32xf32> to vector<2x32xf32>
    %357 = vector.extract_strided_slice %353 {offsets = [0, 0], sizes = [2, 32], strides = [1, 1]} : vector<4x32xf32> to vector<2x32xf32>
    %358 = vector.extract_strided_slice %355 {offsets = [2, 0], sizes = [2, 32], strides = [1, 1]} : vector<4x32xf32> to vector<2x32xf32>
    %359 = vector.extract_strided_slice %353 {offsets = [2, 0], sizes = [2, 32], strides = [1, 1]} : vector<4x32xf32> to vector<2x32xf32>
    %c11_i32 = arith.constant 11 : i32
    %c2_i32_77 = arith.constant 2 : i32
    %360 = arith.muli %c11_i32, %c2_i32_77 : i32
    %361 = arith.index_cast %360 : i32 to index
    %c0_78 = arith.constant 0 : index
    %362 = vector.load %arg6[%361, %c0_78] : memref<32x128xf32, #tpu.memory_space<vmem>>, vector<2x128xf32>
    %363 = tpu.concatenate %356, %358 in 1 : vector<2x32xf32>, vector<2x32xf32> -> vector<2x64xf32>
    %364 = arith.truncf %363 : vector<2x64xf32> to vector<2x64xbf16>
    %cst_79 = arith.constant dense<0.000000e+00> : vector<2x256xf32>
    %365 = tpu.matmul %364, %0, %cst_79 {dimension_numbers = #tpu.dot_dimension_numbers<[1], [0], [0], [1], [0, 0, 1, 1], [], []>} : vector<2x64xbf16>, vector<64x256xbf16>, vector<2x256xf32> -> vector<2x256xf32>
    %366 = vector.extract_strided_slice %365 {offsets = [0, 0], sizes = [2, 128], strides = [1, 1]} : vector<2x256xf32> to vector<2x128xf32>
    %367 = arith.addf %362, %366 : vector<2x128xf32>
    %368 = vector.extract_strided_slice %365 {offsets = [0, 128], sizes = [2, 128], strides = [1, 1]} : vector<2x256xf32> to vector<2x128xf32>
    %369 = arith.addf %368, %3 : vector<2x128xf32>
    %370 = tpu.concatenate %367, %369 in 0 : vector<2x128xf32>, vector<2x128xf32> -> vector<4x128xf32>
    %371 = tpu.concatenate %357, %359 in 0 : vector<2x32xf32>, vector<2x32xf32> -> vector<4x32xf32>
    %cst_80 = arith.constant 5.000000e-01 : f32
    %372 = vector.broadcast %cst_80 : f32 to vector<4x128xf32>
    %373 = arith.mulf %372, %370 : vector<4x128xf32>
    %374 = math.tanh %373 : vector<4x128xf32>
    %cst_81 = arith.constant 5.000000e-01 : f32
    %375 = vector.broadcast %cst_81 : f32 to vector<4x128xf32>
    %376 = arith.mulf %375, %374 : vector<4x128xf32>
    %cst_82 = arith.constant 5.000000e-01 : f32
    %377 = vector.broadcast %cst_82 : f32 to vector<4x128xf32>
    %378 = arith.addf %376, %377 : vector<4x128xf32>
    %379 = math.tanh %370 : vector<4x128xf32>
    %380 = vector.extract_strided_slice %378 {offsets = [0, 0], sizes = [4, 32], strides = [1, 1]} : vector<4x128xf32> to vector<4x32xf32>
    %381 = vector.extract_strided_slice %378 {offsets = [0, 32], sizes = [4, 32], strides = [1, 1]} : vector<4x128xf32> to vector<4x32xf32>
    %382 = vector.extract_strided_slice %378 {offsets = [0, 96], sizes = [4, 32], strides = [1, 1]} : vector<4x128xf32> to vector<4x32xf32>
    %383 = vector.extract_strided_slice %379 {offsets = [0, 64], sizes = [4, 32], strides = [1, 1]} : vector<4x128xf32> to vector<4x32xf32>
    %384 = arith.mulf %381, %371 : vector<4x32xf32>
    %385 = arith.mulf %380, %383 : vector<4x32xf32>
    %386 = arith.addf %384, %385 : vector<4x32xf32>
    %387 = math.tanh %386 : vector<4x32xf32>
    %388 = arith.mulf %382, %387 : vector<4x32xf32>
    %389 = vector.extract_strided_slice %388 {offsets = [0, 0], sizes = [2, 32], strides = [1, 1]} : vector<4x32xf32> to vector<2x32xf32>
    %390 = vector.extract_strided_slice %386 {offsets = [0, 0], sizes = [2, 32], strides = [1, 1]} : vector<4x32xf32> to vector<2x32xf32>
    %391 = vector.extract_strided_slice %388 {offsets = [2, 0], sizes = [2, 32], strides = [1, 1]} : vector<4x32xf32> to vector<2x32xf32>
    %392 = vector.extract_strided_slice %386 {offsets = [2, 0], sizes = [2, 32], strides = [1, 1]} : vector<4x32xf32> to vector<2x32xf32>
    %c12_i32 = arith.constant 12 : i32
    %c2_i32_83 = arith.constant 2 : i32
    %393 = arith.muli %c12_i32, %c2_i32_83 : i32
    %394 = arith.index_cast %393 : i32 to index
    %c0_84 = arith.constant 0 : index
    %395 = vector.load %arg6[%394, %c0_84] : memref<32x128xf32, #tpu.memory_space<vmem>>, vector<2x128xf32>
    %396 = tpu.concatenate %389, %391 in 1 : vector<2x32xf32>, vector<2x32xf32> -> vector<2x64xf32>
    %397 = arith.truncf %396 : vector<2x64xf32> to vector<2x64xbf16>
    %cst_85 = arith.constant dense<0.000000e+00> : vector<2x256xf32>
    %398 = tpu.matmul %397, %0, %cst_85 {dimension_numbers = #tpu.dot_dimension_numbers<[1], [0], [0], [1], [0, 0, 1, 1], [], []>} : vector<2x64xbf16>, vector<64x256xbf16>, vector<2x256xf32> -> vector<2x256xf32>
    %399 = vector.extract_strided_slice %398 {offsets = [0, 0], sizes = [2, 128], strides = [1, 1]} : vector<2x256xf32> to vector<2x128xf32>
    %400 = arith.addf %395, %399 : vector<2x128xf32>
    %401 = vector.extract_strided_slice %398 {offsets = [0, 128], sizes = [2, 128], strides = [1, 1]} : vector<2x256xf32> to vector<2x128xf32>
    %402 = arith.addf %401, %3 : vector<2x128xf32>
    %403 = tpu.concatenate %400, %402 in 0 : vector<2x128xf32>, vector<2x128xf32> -> vector<4x128xf32>
    %404 = tpu.concatenate %390, %392 in 0 : vector<2x32xf32>, vector<2x32xf32> -> vector<4x32xf32>
    %cst_86 = arith.constant 5.000000e-01 : f32
    %405 = vector.broadcast %cst_86 : f32 to vector<4x128xf32>
    %406 = arith.mulf %405, %403 : vector<4x128xf32>
    %407 = math.tanh %406 : vector<4x128xf32>
    %cst_87 = arith.constant 5.000000e-01 : f32
    %408 = vector.broadcast %cst_87 : f32 to vector<4x128xf32>
    %409 = arith.mulf %408, %407 : vector<4x128xf32>
    %cst_88 = arith.constant 5.000000e-01 : f32
    %410 = vector.broadcast %cst_88 : f32 to vector<4x128xf32>
    %411 = arith.addf %409, %410 : vector<4x128xf32>
    %412 = math.tanh %403 : vector<4x128xf32>
    %413 = vector.extract_strided_slice %411 {offsets = [0, 0], sizes = [4, 32], strides = [1, 1]} : vector<4x128xf32> to vector<4x32xf32>
    %414 = vector.extract_strided_slice %411 {offsets = [0, 32], sizes = [4, 32], strides = [1, 1]} : vector<4x128xf32> to vector<4x32xf32>
    %415 = vector.extract_strided_slice %411 {offsets = [0, 96], sizes = [4, 32], strides = [1, 1]} : vector<4x128xf32> to vector<4x32xf32>
    %416 = vector.extract_strided_slice %412 {offsets = [0, 64], sizes = [4, 32], strides = [1, 1]} : vector<4x128xf32> to vector<4x32xf32>
    %417 = arith.mulf %414, %404 : vector<4x32xf32>
    %418 = arith.mulf %413, %416 : vector<4x32xf32>
    %419 = arith.addf %417, %418 : vector<4x32xf32>
    %420 = math.tanh %419 : vector<4x32xf32>
    %421 = arith.mulf %415, %420 : vector<4x32xf32>
    %422 = vector.extract_strided_slice %421 {offsets = [0, 0], sizes = [2, 32], strides = [1, 1]} : vector<4x32xf32> to vector<2x32xf32>
    %423 = vector.extract_strided_slice %419 {offsets = [0, 0], sizes = [2, 32], strides = [1, 1]} : vector<4x32xf32> to vector<2x32xf32>
    %424 = vector.extract_strided_slice %421 {offsets = [2, 0], sizes = [2, 32], strides = [1, 1]} : vector<4x32xf32> to vector<2x32xf32>
    %425 = vector.extract_strided_slice %419 {offsets = [2, 0], sizes = [2, 32], strides = [1, 1]} : vector<4x32xf32> to vector<2x32xf32>
    %c13_i32 = arith.constant 13 : i32
    %c2_i32_89 = arith.constant 2 : i32
    %426 = arith.muli %c13_i32, %c2_i32_89 : i32
    %427 = arith.index_cast %426 : i32 to index
    %c0_90 = arith.constant 0 : index
    %428 = vector.load %arg6[%427, %c0_90] : memref<32x128xf32, #tpu.memory_space<vmem>>, vector<2x128xf32>
    %429 = tpu.concatenate %422, %424 in 1 : vector<2x32xf32>, vector<2x32xf32> -> vector<2x64xf32>
    %430 = arith.truncf %429 : vector<2x64xf32> to vector<2x64xbf16>
    %cst_91 = arith.constant dense<0.000000e+00> : vector<2x256xf32>
    %431 = tpu.matmul %430, %0, %cst_91 {dimension_numbers = #tpu.dot_dimension_numbers<[1], [0], [0], [1], [0, 0, 1, 1], [], []>} : vector<2x64xbf16>, vector<64x256xbf16>, vector<2x256xf32> -> vector<2x256xf32>
    %432 = vector.extract_strided_slice %431 {offsets = [0, 0], sizes = [2, 128], strides = [1, 1]} : vector<2x256xf32> to vector<2x128xf32>
    %433 = arith.addf %428, %432 : vector<2x128xf32>
    %434 = vector.extract_strided_slice %431 {offsets = [0, 128], sizes = [2, 128], strides = [1, 1]} : vector<2x256xf32> to vector<2x128xf32>
    %435 = arith.addf %434, %3 : vector<2x128xf32>
    %436 = tpu.concatenate %433, %435 in 0 : vector<2x128xf32>, vector<2x128xf32> -> vector<4x128xf32>
    %437 = tpu.concatenate %423, %425 in 0 : vector<2x32xf32>, vector<2x32xf32> -> vector<4x32xf32>
    %cst_92 = arith.constant 5.000000e-01 : f32
    %438 = vector.broadcast %cst_92 : f32 to vector<4x128xf32>
    %439 = arith.mulf %438, %436 : vector<4x128xf32>
    %440 = math.tanh %439 : vector<4x128xf32>
    %cst_93 = arith.constant 5.000000e-01 : f32
    %441 = vector.broadcast %cst_93 : f32 to vector<4x128xf32>
    %442 = arith.mulf %441, %440 : vector<4x128xf32>
    %cst_94 = arith.constant 5.000000e-01 : f32
    %443 = vector.broadcast %cst_94 : f32 to vector<4x128xf32>
    %444 = arith.addf %442, %443 : vector<4x128xf32>
    %445 = math.tanh %436 : vector<4x128xf32>
    %446 = vector.extract_strided_slice %444 {offsets = [0, 0], sizes = [4, 32], strides = [1, 1]} : vector<4x128xf32> to vector<4x32xf32>
    %447 = vector.extract_strided_slice %444 {offsets = [0, 32], sizes = [4, 32], strides = [1, 1]} : vector<4x128xf32> to vector<4x32xf32>
    %448 = vector.extract_strided_slice %444 {offsets = [0, 96], sizes = [4, 32], strides = [1, 1]} : vector<4x128xf32> to vector<4x32xf32>
    %449 = vector.extract_strided_slice %445 {offsets = [0, 64], sizes = [4, 32], strides = [1, 1]} : vector<4x128xf32> to vector<4x32xf32>
    %450 = arith.mulf %447, %437 : vector<4x32xf32>
    %451 = arith.mulf %446, %449 : vector<4x32xf32>
    %452 = arith.addf %450, %451 : vector<4x32xf32>
    %453 = math.tanh %452 : vector<4x32xf32>
    %454 = arith.mulf %448, %453 : vector<4x32xf32>
    %455 = vector.extract_strided_slice %454 {offsets = [0, 0], sizes = [2, 32], strides = [1, 1]} : vector<4x32xf32> to vector<2x32xf32>
    %456 = vector.extract_strided_slice %452 {offsets = [0, 0], sizes = [2, 32], strides = [1, 1]} : vector<4x32xf32> to vector<2x32xf32>
    %457 = vector.extract_strided_slice %454 {offsets = [2, 0], sizes = [2, 32], strides = [1, 1]} : vector<4x32xf32> to vector<2x32xf32>
    %458 = vector.extract_strided_slice %452 {offsets = [2, 0], sizes = [2, 32], strides = [1, 1]} : vector<4x32xf32> to vector<2x32xf32>
    %c14_i32 = arith.constant 14 : i32
    %c2_i32_95 = arith.constant 2 : i32
    %459 = arith.muli %c14_i32, %c2_i32_95 : i32
    %460 = arith.index_cast %459 : i32 to index
    %c0_96 = arith.constant 0 : index
    %461 = vector.load %arg6[%460, %c0_96] : memref<32x128xf32, #tpu.memory_space<vmem>>, vector<2x128xf32>
    %462 = tpu.concatenate %455, %457 in 1 : vector<2x32xf32>, vector<2x32xf32> -> vector<2x64xf32>
    %463 = arith.truncf %462 : vector<2x64xf32> to vector<2x64xbf16>
    %cst_97 = arith.constant dense<0.000000e+00> : vector<2x256xf32>
    %464 = tpu.matmul %463, %0, %cst_97 {dimension_numbers = #tpu.dot_dimension_numbers<[1], [0], [0], [1], [0, 0, 1, 1], [], []>} : vector<2x64xbf16>, vector<64x256xbf16>, vector<2x256xf32> -> vector<2x256xf32>
    %465 = vector.extract_strided_slice %464 {offsets = [0, 0], sizes = [2, 128], strides = [1, 1]} : vector<2x256xf32> to vector<2x128xf32>
    %466 = arith.addf %461, %465 : vector<2x128xf32>
    %467 = vector.extract_strided_slice %464 {offsets = [0, 128], sizes = [2, 128], strides = [1, 1]} : vector<2x256xf32> to vector<2x128xf32>
    %468 = arith.addf %467, %3 : vector<2x128xf32>
    %469 = tpu.concatenate %466, %468 in 0 : vector<2x128xf32>, vector<2x128xf32> -> vector<4x128xf32>
    %470 = tpu.concatenate %456, %458 in 0 : vector<2x32xf32>, vector<2x32xf32> -> vector<4x32xf32>
    %cst_98 = arith.constant 5.000000e-01 : f32
    %471 = vector.broadcast %cst_98 : f32 to vector<4x128xf32>
    %472 = arith.mulf %471, %469 : vector<4x128xf32>
    %473 = math.tanh %472 : vector<4x128xf32>
    %cst_99 = arith.constant 5.000000e-01 : f32
    %474 = vector.broadcast %cst_99 : f32 to vector<4x128xf32>
    %475 = arith.mulf %474, %473 : vector<4x128xf32>
    %cst_100 = arith.constant 5.000000e-01 : f32
    %476 = vector.broadcast %cst_100 : f32 to vector<4x128xf32>
    %477 = arith.addf %475, %476 : vector<4x128xf32>
    %478 = math.tanh %469 : vector<4x128xf32>
    %479 = vector.extract_strided_slice %477 {offsets = [0, 0], sizes = [4, 32], strides = [1, 1]} : vector<4x128xf32> to vector<4x32xf32>
    %480 = vector.extract_strided_slice %477 {offsets = [0, 32], sizes = [4, 32], strides = [1, 1]} : vector<4x128xf32> to vector<4x32xf32>
    %481 = vector.extract_strided_slice %477 {offsets = [0, 96], sizes = [4, 32], strides = [1, 1]} : vector<4x128xf32> to vector<4x32xf32>
    %482 = vector.extract_strided_slice %478 {offsets = [0, 64], sizes = [4, 32], strides = [1, 1]} : vector<4x128xf32> to vector<4x32xf32>
    %483 = arith.mulf %480, %470 : vector<4x32xf32>
    %484 = arith.mulf %479, %482 : vector<4x32xf32>
    %485 = arith.addf %483, %484 : vector<4x32xf32>
    %486 = math.tanh %485 : vector<4x32xf32>
    %487 = arith.mulf %481, %486 : vector<4x32xf32>
    %488 = vector.extract_strided_slice %487 {offsets = [0, 0], sizes = [2, 32], strides = [1, 1]} : vector<4x32xf32> to vector<2x32xf32>
    %489 = vector.extract_strided_slice %485 {offsets = [0, 0], sizes = [2, 32], strides = [1, 1]} : vector<4x32xf32> to vector<2x32xf32>
    %490 = vector.extract_strided_slice %487 {offsets = [2, 0], sizes = [2, 32], strides = [1, 1]} : vector<4x32xf32> to vector<2x32xf32>
    %491 = vector.extract_strided_slice %485 {offsets = [2, 0], sizes = [2, 32], strides = [1, 1]} : vector<4x32xf32> to vector<2x32xf32>
    %c15_i32 = arith.constant 15 : i32
    %c2_i32_101 = arith.constant 2 : i32
    %492 = arith.muli %c15_i32, %c2_i32_101 : i32
    %493 = arith.index_cast %492 : i32 to index
    %c0_102 = arith.constant 0 : index
    %494 = vector.load %arg6[%493, %c0_102] : memref<32x128xf32, #tpu.memory_space<vmem>>, vector<2x128xf32>
    %495 = tpu.concatenate %488, %490 in 1 : vector<2x32xf32>, vector<2x32xf32> -> vector<2x64xf32>
    %496 = arith.truncf %495 : vector<2x64xf32> to vector<2x64xbf16>
    %cst_103 = arith.constant dense<0.000000e+00> : vector<2x256xf32>
    %497 = tpu.matmul %496, %0, %cst_103 {dimension_numbers = #tpu.dot_dimension_numbers<[1], [0], [0], [1], [0, 0, 1, 1], [], []>} : vector<2x64xbf16>, vector<64x256xbf16>, vector<2x256xf32> -> vector<2x256xf32>
    %498 = vector.extract_strided_slice %497 {offsets = [0, 0], sizes = [2, 128], strides = [1, 1]} : vector<2x256xf32> to vector<2x128xf32>
    %499 = arith.addf %494, %498 : vector<2x128xf32>
    %500 = vector.extract_strided_slice %497 {offsets = [0, 128], sizes = [2, 128], strides = [1, 1]} : vector<2x256xf32> to vector<2x128xf32>
    %501 = arith.addf %500, %3 : vector<2x128xf32>
    %502 = tpu.concatenate %499, %501 in 0 : vector<2x128xf32>, vector<2x128xf32> -> vector<4x128xf32>
    %503 = tpu.concatenate %489, %491 in 0 : vector<2x32xf32>, vector<2x32xf32> -> vector<4x32xf32>
    %cst_104 = arith.constant 5.000000e-01 : f32
    %504 = vector.broadcast %cst_104 : f32 to vector<4x128xf32>
    %505 = arith.mulf %504, %502 : vector<4x128xf32>
    %506 = math.tanh %505 : vector<4x128xf32>
    %cst_105 = arith.constant 5.000000e-01 : f32
    %507 = vector.broadcast %cst_105 : f32 to vector<4x128xf32>
    %508 = arith.mulf %507, %506 : vector<4x128xf32>
    %cst_106 = arith.constant 5.000000e-01 : f32
    %509 = vector.broadcast %cst_106 : f32 to vector<4x128xf32>
    %510 = arith.addf %508, %509 : vector<4x128xf32>
    %511 = math.tanh %502 : vector<4x128xf32>
    %512 = vector.extract_strided_slice %510 {offsets = [0, 0], sizes = [4, 32], strides = [1, 1]} : vector<4x128xf32> to vector<4x32xf32>
    %513 = vector.extract_strided_slice %510 {offsets = [0, 32], sizes = [4, 32], strides = [1, 1]} : vector<4x128xf32> to vector<4x32xf32>
    %514 = vector.extract_strided_slice %510 {offsets = [0, 96], sizes = [4, 32], strides = [1, 1]} : vector<4x128xf32> to vector<4x32xf32>
    %515 = vector.extract_strided_slice %511 {offsets = [0, 64], sizes = [4, 32], strides = [1, 1]} : vector<4x128xf32> to vector<4x32xf32>
    %516 = arith.mulf %513, %503 : vector<4x32xf32>
    %517 = arith.mulf %512, %515 : vector<4x32xf32>
    %518 = arith.addf %516, %517 : vector<4x32xf32>
    %519 = math.tanh %518 : vector<4x32xf32>
    %520 = arith.mulf %514, %519 : vector<4x32xf32>
    %521 = vector.extract_strided_slice %520 {offsets = [0, 0], sizes = [2, 32], strides = [1, 1]} : vector<4x32xf32> to vector<2x32xf32>
    %522 = vector.extract_strided_slice %518 {offsets = [0, 0], sizes = [2, 32], strides = [1, 1]} : vector<4x32xf32> to vector<2x32xf32>
    %523 = vector.extract_strided_slice %520 {offsets = [2, 0], sizes = [2, 32], strides = [1, 1]} : vector<4x32xf32> to vector<2x32xf32>
    %524 = vector.extract_strided_slice %518 {offsets = [2, 0], sizes = [2, 32], strides = [1, 1]} : vector<4x32xf32> to vector<2x32xf32>
    %c15_i32_107 = arith.constant 15 : i32
    %cst_108 = arith.constant 0.000000e+00 : f32
    %525 = vector.broadcast %cst_108 : f32 to vector<2x128xf32>
    %526 = tpu.concatenate %521, %523 in 1 : vector<2x32xf32>, vector<2x32xf32> -> vector<2x64xf32>
    %527 = arith.truncf %526 : vector<2x64xf32> to vector<2x64xbf16>
    %cst_109 = arith.constant dense<0.000000e+00> : vector<2x256xf32>
    %528 = tpu.matmul %527, %0, %cst_109 {dimension_numbers = #tpu.dot_dimension_numbers<[1], [0], [0], [1], [0, 0, 1, 1], [], []>} : vector<2x64xbf16>, vector<64x256xbf16>, vector<2x256xf32> -> vector<2x256xf32>
    %529 = vector.extract_strided_slice %528 {offsets = [0, 0], sizes = [2, 128], strides = [1, 1]} : vector<2x256xf32> to vector<2x128xf32>
    %530 = arith.addf %525, %529 : vector<2x128xf32>
    %531 = vector.extract_strided_slice %528 {offsets = [0, 128], sizes = [2, 128], strides = [1, 1]} : vector<2x256xf32> to vector<2x128xf32>
    %532 = arith.addf %531, %3 : vector<2x128xf32>
    %533 = tpu.concatenate %530, %532 in 0 : vector<2x128xf32>, vector<2x128xf32> -> vector<4x128xf32>
    %534 = tpu.concatenate %522, %524 in 0 : vector<2x32xf32>, vector<2x32xf32> -> vector<4x32xf32>
    %cst_110 = arith.constant 5.000000e-01 : f32
    %535 = vector.broadcast %cst_110 : f32 to vector<4x128xf32>
    %536 = arith.mulf %535, %533 : vector<4x128xf32>
    %537 = math.tanh %536 : vector<4x128xf32>
    %cst_111 = arith.constant 5.000000e-01 : f32
    %538 = vector.broadcast %cst_111 : f32 to vector<4x128xf32>
    %539 = arith.mulf %538, %537 : vector<4x128xf32>
    %cst_112 = arith.constant 5.000000e-01 : f32
    %540 = vector.broadcast %cst_112 : f32 to vector<4x128xf32>
    %541 = arith.addf %539, %540 : vector<4x128xf32>
    %542 = math.tanh %533 : vector<4x128xf32>
    %543 = vector.extract_strided_slice %541 {offsets = [0, 0], sizes = [4, 32], strides = [1, 1]} : vector<4x128xf32> to vector<4x32xf32>
    %544 = vector.extract_strided_slice %541 {offsets = [0, 32], sizes = [4, 32], strides = [1, 1]} : vector<4x128xf32> to vector<4x32xf32>
    %545 = vector.extract_strided_slice %541 {offsets = [0, 96], sizes = [4, 32], strides = [1, 1]} : vector<4x128xf32> to vector<4x32xf32>
    %546 = vector.extract_strided_slice %542 {offsets = [0, 64], sizes = [4, 32], strides = [1, 1]} : vector<4x128xf32> to vector<4x32xf32>
    %547 = arith.mulf %544, %534 : vector<4x32xf32>
    %548 = arith.mulf %543, %546 : vector<4x32xf32>
    %549 = arith.addf %547, %548 : vector<4x32xf32>
    %550 = math.tanh %549 : vector<4x32xf32>
    %551 = arith.mulf %545, %550 : vector<4x32xf32>
    %552 = vector.extract_strided_slice %551 {offsets = [2, 0], sizes = [2, 32], strides = [1, 1]} : vector<4x32xf32> to vector<2x32xf32>
    %553 = arith.addf %521, %552 : vector<2x32xf32>
    %cst_113 = arith.constant 5.000000e-01 : f32
    %554 = vector.broadcast %cst_113 : f32 to vector<2x32xf32>
    %555 = arith.mulf %553, %554 : vector<2x32xf32>
    %c0_114 = arith.constant 0 : index
    %c0_115 = arith.constant 0 : index
    %556 = vector.load %arg5[%c0_114, %c0_115] : memref<2x32xf32, #tpu.memory_space<vmem>>, vector<2x32xf32>
    tpu.vector_store %arg5[%c0_114, %c0_115], %555 {strides = array<i32>} : memref<2x32xf32, #tpu.memory_space<vmem>>, vector<2x32xf32>,
    return
  }
}

</mosaic_0001>

<llo_original>
// kernel: tpu_custom_call.1
$region0: #{tpu_custom_call.1}
  #allocation0 [shape = 'u32[]', space=smem, size = 0x4, offset = 0x4, fixed_abs, tag = 'smem constant byte address 0x4 - core index']
  #allocation1 [shape = 'u32[144,128]{1,0:T(1,128)}', space=vmem, size = 0x12000, scoped, tag = 'internal scratch']
  #allocation2 [shape = 'f32[32,128]{1,0:T(8,128)}', space=vmem, size = 0x4000, scoped, tag = 'scratch operand']
  %s0 = inlined_call_operand.hbm [shape: bf16[32,32], index: 0, kind: input, shape index: {}]
  %s1 = inlined_call_operand.hbm [shape: bf16[32,128], index: 1, kind: input, shape index: {}]
  %s2 = inlined_call_operand.vmem [shape: f32[1,128], index: 2, kind: input, shape index: {}]
  %s3 = inlined_call_operand.hbm [shape: bf16[64,256], index: 3, kind: input, shape index: {}]
  %s4 = inlined_call_operand.vmem [shape: f32[1,128], index: 4, kind: input, shape index: {}]
  %s5 = inlined_call_operand.hbm [shape: f32[2,32], index: 5, kind: output, shape index: {}]
  %s6 = sld [smem:[#allocation0]]
  $region42: #{tpu_custom_call.1} parent=0
    _
  %s8 = ssub.s32 1, %s6
  %s9 = scalar_select 0, %s8, %s6
  $region1: #{tpu_custom_call.1} parent=0
    #allocation3 [shape = 'u8[8192]{0}', space=vmem, size = 0x2000, scoped, tag = 'input window, operand 0, single buffered']
    #allocation4 [shape = 's32[1]{0}', space=sflag, size = 0x4, scoped, tag = 'scoped memory for tpu_custom_call.1']
    #allocation5 [shape = 's32[1]{0}', space=sflag, size = 0x4, scoped, tag = 'scoped memory for tpu_custom_call.1']
    #allocation6 [shape = 'u8[8192]{0}', space=vmem, size = 0x2000, scoped, tag = 'input window, operand 1, single buffered']
    #allocation7 [shape = 's32[1]{0}', space=sflag, size = 0x4, scoped, tag = 'scoped memory for tpu_custom_call.1']
    #allocation8 [shape = 'u8[32768]{0}', space=vmem, size = 0x8000, scoped, tag = 'input window, operand 3, single buffered']
    #allocation9 [shape = 'u8[1024]{0}', space=vmem, size = 0x400, scoped, tag = 'output window, operand 0, single buffered']
    %10 = vsyncpa [#allocation4], 0
    %11 = vsyncpa [#allocation7], 0
    %12 = vsyncpa [#allocation5], 0
    // Predicated region
    $region2: #{tpu_custom_call.1} parent=1 // pred_check
      _
    $region3: #{tpu_custom_call.1} parent=1 // pred_check_branch
      %14 = sbr.rel (0) target = $region5
    $region4: #{tpu_custom_call.1} parent=1 // pred_region
      %s16 = ssub.s32 256, 256
      %17 = vsyncadd [#allocation4], %s16
      %s18 = sshll.u32 [#allocation3], 4
      %s19 = int_to_ptr.vmem [resolvable:$true] %s18
      %24 = dma.hbm_to_vmem [thread:$0]  %s0, 256, %s19, [#allocation4], 64, 64, 4
    $region5: #{tpu_custom_call.1} parent=1 // pred_fallthru
      _
    // Predicated region
    $region6: #{tpu_custom_call.1} parent=1 // pred_check
      _
    $region7: #{tpu_custom_call.1} parent=1 // pred_check_branch
      %26 = sbr.rel (0) target = $region9
    $region8: #{tpu_custom_call.1} parent=1 // pred_region
      %s28 = ssub.s32 256, 256
      %29 = vsyncadd [#allocation7], %s28
      %s30 = sshll.u32 [#allocation6], 4
      %s31 = int_to_ptr.vmem [resolvable:$true] %s30
      %36 = dma.hbm_to_vmem [thread:$0]  %s1, 256, %s31, [#allocation7], 64, 64, 4
    $region9: #{tpu_custom_call.1} parent=1 // pred_fallthru
      _
    // Predicated region
    $region10: #{tpu_custom_call.1} parent=1 // pred_check
      _
    $region11: #{tpu_custom_call.1} parent=1 // pred_check_branch
      %38 = sbr.rel (0) target = $region13
    $region12: #{tpu_custom_call.1} parent=1 // pred_region
      _
    $region13: #{tpu_custom_call.1} parent=1 // pred_fallthru
      _
    // Predicated region
    $region14: #{tpu_custom_call.1} parent=1 // pred_check
      _
    $region15: #{tpu_custom_call.1} parent=1 // pred_check_branch
      %40 = sbr.rel (0) target = $region17
    $region16: #{tpu_custom_call.1} parent=1 // pred_region
      %s42 = ssub.s32 1024, 1024
      %43 = vsyncadd [#allocation7], %s42
      %s44 = sshll.u32 [#allocation8], 4
      %s45 = int_to_ptr.vmem [resolvable:$true] %s44
      %50 = dma.hbm_to_vmem [thread:$0]  %s3, 1024, %s45, [#allocation7], 128, 128, 8
    $region17: #{tpu_custom_call.1} parent=1 // pred_fallthru
      _
    // Predicated region
    $region18: #{tpu_custom_call.1} parent=1 // pred_check
      _
    $region19: #{tpu_custom_call.1} parent=1 // pred_check_branch
      %52 = sbr.rel (0) target = $region21
    $region20: #{tpu_custom_call.1} parent=1 // pred_region
      _
    $region21: #{tpu_custom_call.1} parent=1 // pred_fallthru
      _
    // Predicated region
    $region22: #{tpu_custom_call.1} parent=1 // pred_check
      _
    $region23: #{tpu_custom_call.1} parent=1 // pred_check_branch
      %54 = sbr.rel (0) target = $region25
    $region24: #{tpu_custom_call.1} parent=1 // pred_region
      %55 = dma.done [#allocation4], 256
    $region25: #{tpu_custom_call.1} parent=1 // pred_fallthru
      _
    // Predicated region
    $region26: #{tpu_custom_call.1} parent=1 // pred_check
      _
    $region27: #{tpu_custom_call.1} parent=1 // pred_check_branch
      %57 = sbr.rel (0) target = $region29
    $region28: #{tpu_custom_call.1} parent=1 // pred_region
      %58 = dma.done [#allocation7], 256
    $region29: #{tpu_custom_call.1} parent=1 // pred_fallthru
      _
    // Predicated region
    $region30: #{tpu_custom_call.1} parent=1 // pred_check
      _
    $region31: #{tpu_custom_call.1} parent=1 // pred_check_branch
      %60 = sbr.rel (0) target = $region33
    $region32: #{tpu_custom_call.1} parent=1 // pred_region
      %61 = dma.done [#allocation7], 1024
    $region33: #{tpu_custom_call.1} parent=1 // pred_fallthru
      _
    %v63 = vld [vmem:[#allocation8] sm:$0xff]
    %v64 = vld [vmem:[#allocation8 + $0x8] sm:$0xff]
    %v65 = vld [vmem:[#allocation8 + $0x10] sm:$0xff]
    %v66 = vld [vmem:[#allocation8 + $0x18] sm:$0xff]
    %v67 = vld [vmem:[#allocation8 + $0x20] sm:$0xff]
    %v68 = vld [vmem:[#allocation8 + $0x28] sm:$0xff]
    %v69 = vld [vmem:[#allocation8 + $0x30] sm:$0xff]
    %v70 = vld [vmem:[#allocation8 + $0x38] sm:$0xff]
    %v71 = vld [vmem:[%s4] sm:$0x1]
    %v73 = vlaneseq
    %v74 = vshrl.u32 %v73, 7
    %v75 = vsub.s32 0, %v74
    %v76 = vrot.slane %v71, %v75
    %v78 = vld [vmem:[#allocation3] sm:$0xf]
    %v79 = vld [vmem:[#allocation3 + $0x4] sm:$0xf]
    %v80 = vld [vmem:[#allocation3 + $0x8] sm:$0xf]
    %v81 = vld [vmem:[#allocation3 + $0xc] sm:$0xf]
    %v82 = vld [vmem:[#allocation6] sm:$0xf]
    %v83 = vld [vmem:[#allocation6 + $0x4] sm:$0xf]
    %v84 = vld [vmem:[#allocation6 + $0x8] sm:$0xf]
    %v85 = vld [vmem:[#allocation6 + $0xc] sm:$0xf]
    %v86 = vld [vmem:[%s2] sm:$0x1]
    %v88 = vlaneseq
    %v89 = vshrl.u32 %v88, 7
    %v90 = vsub.s32 0, %v89
    %v91 = vrot.slane %v86, %v90
    %v97 = vunpack.c.l.b16 %v78
    %v98 = vunpack.c.l.b16 %v79
    %v99 = vunpack.c.l.b16 %v80
    %v100 = vunpack.c.l.b16 %v81
    %v101 = vpack.c.b16 %v98, %v97
    %v102 = vpack.c.b16 %v100, %v99
    %v107 = vunpack.c.l.b16 %v82
    %v108 = vunpack.c.l.b16 %v83
    %v109 = vunpack.c.l.b16 %v84
    %v110 = vunpack.c.l.b16 %v85
    %v111 = vpack.c.b16 %v108, %v107
    %v112 = vpack.c.b16 %v110, %v109
    %vm115 = vcmask 261120
    %v117 = vsel %vm115, %v101, 0
    %v120 = vsel %vm115, %v102, 0
    %122 = vmatprep.subr.bf16.mxu0 0
    %123 = vmatpush1.bf16.msra.mxu0 %v111
    %124 = vmatprep.subr.bf16.mxu0 0
    %125 = vmatpush1.bf16.msra.mxu0 %v112
    %126 = vmatprep.subr.bf16.mxu0 0
    %127 = vmatpush1.bf16.msra.mxu0 0
    %128 = vmatprep.subr.bf16.mxu0 0
    %129 = vmatpush1.bf16.msra.mxu0 0
    %130 = vmatprep.subr.bf16.mxu0 0
    %131 = vmatpush1.bf16.msra.mxu0 0
    %132 = vmatprep.subr.bf16.mxu0 0
    %133 = vmatpush1.bf16.msra.mxu0 0
    %134 = vmatprep.subr.bf16.mxu0 0
    %135 = vmatpush1.bf16.msra.mxu0 0
    %136 = vmatprep.subr.bf16.mxu0 0
    %137 = vmatpush1.bf16.msra.mxu0 0
    %138 = vmatprep.subr.bf16.mxu0 0
    %139 = vmatpush1.bf16.msra.mxu0 0
    %140 = vmatprep.subr.bf16.mxu0 0
    %141 = vmatpush1.bf16.msra.mxu0 0
    %142 = vmatprep.subr.bf16.mxu0 0
    %143 = vmatpush1.bf16.msra.mxu0 0
    %144 = vmatprep.subr.bf16.mxu0 0
    %145 = vmatpush1.bf16.msra.mxu0 0
    %146 = vmatprep.subr.bf16.mxu0 0
    %147 = vmatpush1.bf16.msra.mxu0 0
    %148 = vmatprep.subr.bf16.mxu0 0
    %149 = vmatpush1.bf16.msra.mxu0 0
    %150 = vmatprep.subr.bf16.mxu0 0
    %151 = vmatpush1.bf16.msra.mxu0 0
    %152 = vmatprep.subr.bf16.mxu0 0
    %153 = vmatpush1.bf16.msra.mxu0 0
    %154 = vmatprep.mubr.bf16.mxu0 0
    %155 = vmatmul.mubr.bf16.gmra.mrb[0].mxu0 %v117
    %v156 = vpop.f32.mrb[0].mxu0
    %v157 = vadd.f32 %v91, %v156
    %v158 = vpop.f32.mrb[0].mxu0
    %v159 = vpop.f32.mrb[0].mxu0
    %v160 = vadd.f32 %v91, %v159
    %v161 = vpop.f32.mrb[0].mxu0
    %162 = vmatprep.mubr.bf16.mxu0 0
    %163 = vmatmul.mubr.bf16.gmra.mrb[0].mxu0 %v120
    %v164 = vpop.f32.mrb[0].mxu0
    %v165 = vadd.f32 %v91, %v164
    %v166 = vpop.f32.mrb[0].mxu0
    %v167 = vpop.f32.mrb[0].mxu0
    %v168 = vadd.f32 %v91, %v167
    %v169 = vpop.f32.mrb[0].mxu0
    %170 = vdwg.mxu0
    %171 = vst [vmem:[#allocation2] sm:$0xff] %v157
    %172 = vst [vmem:[#allocation2 + $0x8] sm:$0xff] %v160
    %173 = vst [vmem:[#allocation2 + $0x10] sm:$0xff] %v165
    %174 = vst [vmem:[#allocation2 + $0x18] sm:$0xff] %v168
    %v175 = vld [vmem:[#allocation2] sm:$0x3]
    %v176 = vmul.f32 %v175, 0.5
    %v177 = vtanh.pop %v176
    %v178 = vmul.f32 %v177, 0.5
    %v179 = vadd.f32 %v178, 0.5
    %v180 = vtanh.pop %v175
    %v181 = vmul.f32 %v179, 0.0
    %183 = vrot.lane.b32.xlu0 %v180, 64
    %v184 = vpop.permute.xlu0 %183
    %v186 = vmul.f32 %v179, %v184
    %188 = vrot.lane.b32.xlu0 %v186, 32
    %v189 = vpop.permute.xlu0 %188
    %v191 = vadd.f32 %v181, %v189
    %v192 = vtanh.pop %v191
    %194 = vrot.lane.b32.xlu0 %v192, 64
    %v195 = vpop.permute.xlu0 %194
    %v197 = vmul.f32 %v179, %v195
    %v198 = vld [vmem:[#allocation2 + $0x2] sm:$0x3]
    %200 = vrot.lane.b32.xlu0 %v197, 32
    %v201 = vpop.permute.xlu0 %200
    %v203 = vsel %vm115, %v201, 0.0
    %v204 = vpack.c.bf16 %v203, %v203
    %v213 = vunpack.c.l.b16 %v63
    %v214 = vunpack.c.h.b16 %v63
    %v215 = vunpack.c.l.b16 %v64
    %v216 = vunpack.c.h.b16 %v64
    %v217 = vunpack.c.l.b16 %v65
    %v218 = vunpack.c.h.b16 %v65
    %v219 = vunpack.c.l.b16 %v66
    %v220 = vunpack.c.h.b16 %v66
    %v221 = vunpack.c.l.b16 %v67
    %v222 = vunpack.c.h.b16 %v67
    %v223 = vunpack.c.l.b16 %v68
    %v224 = vunpack.c.h.b16 %v68
    %v225 = vunpack.c.l.b16 %v69
    %v226 = vunpack.c.h.b16 %v69
    %v227 = vunpack.c.l.b16 %v70
    %v228 = vunpack.c.h.b16 %v70
    %v229 = vpack.c.b16 %v215, %v213
    %v230 = vpack.c.b16 %v216, %v214
    %v231 = vpack.c.b16 %v219, %v217
    %v232 = vpack.c.b16 %v220, %v218
    %v233 = vpack.c.b16 %v223, %v221
    %v234 = vpack.c.b16 %v224, %v222
    %v235 = vpack.c.b16 %v227, %v225
    %v236 = vpack.c.b16 %v228, %v226
    %vm245 = vcmask 523264
    %v247 = vsel %vm245, %v204, 0
    %249 = vmatprep.subr.bf16.mxu0 %v230
    %250 = vmatpush1.bf16.msra.mxu0 %v229
    %251 = vmatprep.subr.bf16.mxu0 %v232
    %252 = vmatpush1.bf16.msra.mxu0 %v231
    %253 = vmatprep.subr.bf16.mxu0 %v234
    %254 = vmatpush1.bf16.msra.mxu0 %v233
    %255 = vmatprep.subr.bf16.mxu0 %v236
    %256 = vmatpush1.bf16.msra.mxu0 %v235
    %257 = vmatprep.subr.bf16.mxu0 0
    %258 = vmatpush1.bf16.msra.mxu0 0
    %259 = vmatprep.subr.bf16.mxu0 0
    %260 = vmatpush1.bf16.msra.mxu0 0
    %261 = vmatprep.subr.bf16.mxu0 0
    %262 = vmatpush1.bf16.msra.mxu0 0
    %263 = vmatprep.subr.bf16.mxu0 0
    %264 = vmatpush1.bf16.msra.mxu0 0
    %265 = vmatprep.subr.bf16.mxu0 0
    %266 = vmatpush1.bf16.msra.mxu0 0
    %267 = vmatprep.subr.bf16.mxu0 0
    %268 = vmatpush1.bf16.msra.mxu0 0
    %269 = vmatprep.subr.bf16.mxu0 0
    %270 = vmatpush1.bf16.msra.mxu0 0
    %271 = vmatprep.subr.bf16.mxu0 0
    %272 = vmatpush1.bf16.msra.mxu0 0
    %273 = vmatprep.subr.bf16.mxu0 0
    %274 = vmatpush1.bf16.msra.mxu0 0
    %275 = vmatprep.subr.bf16.mxu0 0
    %276 = vmatpush1.bf16.msra.mxu0 0
    %277 = vmatprep.subr.bf16.mxu0 0
    %278 = vmatpush1.bf16.msra.mxu0 0
    %279 = vmatprep.subr.bf16.mxu0 0
    %280 = vmatpush1.bf16.msra.mxu0 0
    %281 = vmatprep.mubr.bf16.mxu0 0
    %282 = vmatmul.mubr.bf16.gmra.mrb[0].mxu0 %v247
    %v283 = vpop.f32.mrb[0].mxu0
    %v284 = vadd.f32 0.0, %v283
    %v285 = vpop.f32.mrb[0].mxu0
    %v286 = vadd.f32 0.0, %v285
    %v287 = vpop.f32.mrb[0].mxu0
    %v288 = vpop.f32.mrb[0].mxu0
    %289 = vdwg.mxu0
    %v290 = vadd.f32 %v198, %v284
    %v291 = vadd.f32 %v286, %v76
    %v293 = vrot.slane %v291, 6
    %vm295 = vcmask 1041408
    %v296 = vsel %vm295, %v290, %v293
    %v297 = vsel %vm295, %v191, 0.0
    %v298 = vmul.f32 %v296, 0.5
    %v299 = vtanh.pop %v298
    %v300 = vmul.f32 %v299, 0.5
    %v301 = vadd.f32 %v300, 0.5
    %v302 = vtanh.pop %v296
    %v303 = vmul.f32 %v301, %v297
    %305 = vrot.lane.b32.xlu0 %v302, 64
    %v306 = vpop.permute.xlu0 %305
    %v308 = vmul.f32 %v301, %v306
    %310 = vrot.lane.b32.xlu0 %v308, 32
    %v311 = vpop.permute.xlu0 %310
    %v313 = vadd.f32 %v303, %v311
    %v314 = vtanh.pop %v313
    %316 = vrot.lane.b32.xlu0 %v314, 64
    %v317 = vpop.permute.xlu0 %316
    %v319 = vmul.f32 %v301, %v317
    %v320 = vld [vmem:[#allocation2 + $0x4] sm:$0x3]
    %322 = vrot.lane.b32.xlu0 %v319, 32
    %v323 = vpop.permute.xlu0 %322
    %v325 = vrot.slane %v319, 2
    %326 = vrot.lane.b32.xlu0 %v325, 64
    %v327 = vpop.permute.xlu0 %326
    %v329 = vsel %vm115, %v323, %v327
    %v330 = vpack.c.bf16 %v329, %v329
    %v332 = vsel %vm245, %v330, 0
    %334 = vmatprep.subr.bf16.mxu0 %v230
    %335 = vmatpush1.bf16.msra.mxu0 %v229
    %336 = vmatprep.subr.bf16.mxu0 %v232
    %337 = vmatpush1.bf16.msra.mxu0 %v231
    %338 = vmatprep.subr.bf16.mxu0 %v234
    %339 = vmatpush1.bf16.msra.mxu0 %v233
    %340 = vmatprep.subr.bf16.mxu0 %v236
    %341 = vmatpush1.bf16.msra.mxu0 %v235
    %342 = vmatprep.subr.bf16.mxu0 0
    %343 = vmatpush1.bf16.msra.mxu0 0
    %344 = vmatprep.subr.bf16.mxu0 0
    %345 = vmatpush1.bf16.msra.mxu0 0
    %346 = vmatprep.subr.bf16.mxu0 0
    %347 = vmatpush1.bf16.msra.mxu0 0
    %348 = vmatprep.subr.bf16.mxu0 0
    %349 = vmatpush1.bf16.msra.mxu0 0
    %350 = vmatprep.subr.bf16.mxu0 0
    %351 = vmatpush1.bf16.msra.mxu0 0
    %352 = vmatprep.subr.bf16.mxu0 0
    %353 = vmatpush1.bf16.msra.mxu0 0
    %354 = vmatprep.subr.bf16.mxu0 0
    %355 = vmatpush1.bf16.msra.mxu0 0
    %356 = vmatprep.subr.bf16.mxu0 0
    %357 = vmatpush1.bf16.msra.mxu0 0
    %358 = vmatprep.subr.bf16.mxu0 0
    %359 = vmatpush1.bf16.msra.mxu0 0
    %360 = vmatprep.subr.bf16.mxu0 0
    %361 = vmatpush1.bf16.msra.mxu0 0
    %362 = vmatprep.subr.bf16.mxu0 0
    %363 = vmatpush1.bf16.msra.mxu0 0
    %364 = vmatprep.subr.bf16.mxu0 0
    %365 = vmatpush1.bf16.msra.mxu0 0
    %366 = vmatprep.mubr.bf16.mxu0 0
    %367 = vmatmul.mubr.bf16.gmra.mrb[0].mxu0 %v332
    %v368 = vpop.f32.mrb[0].mxu0
    %v369 = vadd.f32 0.0, %v368
    %v370 = vpop.f32.mrb[0].mxu0
    %v371 = vadd.f32 0.0, %v370
    %v372 = vpop.f32.mrb[0].mxu0
    %v373 = vpop.f32.mrb[0].mxu0
    %374 = vdwg.mxu0
    %v375 = vadd.f32 %v320, %v369
    %v376 = vadd.f32 %v371, %v76
    %v378 = vrot.slane %v376, 6
    %v380 = vsel %vm295, %v375, %v378
    %v381 = vmul.f32 %v380, 0.5
    %v382 = vtanh.pop %v381
    %v383 = vmul.f32 %v382, 0.5
    %v384 = vadd.f32 %v383, 0.5
    %v385 = vtanh.pop %v380
    %v386 = vmul.f32 %v384, %v313
    %388 = vrot.lane.b32.xlu0 %v385, 64
    %v389 = vpop.permute.xlu0 %388
    %v391 = vmul.f32 %v384, %v389
    %393 = vrot.lane.b32.xlu0 %v391, 32
    %v394 = vpop.permute.xlu0 %393
    %v396 = vadd.f32 %v386, %v394
    %v397 = vtanh.pop %v396
    %399 = vrot.lane.b32.xlu0 %v397, 64
    %v400 = vpop.permute.xlu0 %399
    %v402 = vmul.f32 %v384, %v400
    %v403 = vld [vmem:[#allocation2 + $0x6] sm:$0x3]
    %405 = vrot.lane.b32.xlu0 %v402, 32
    %v406 = vpop.permute.xlu0 %405
    %v408 = vrot.slane %v402, 2
    %409 = vrot.lane.b32.xlu0 %v408, 64
    %v410 = vpop.permute.xlu0 %409
    %v412 = vsel %vm115, %v406, %v410
    %v413 = vpack.c.bf16 %v412, %v412
    %v415 = vsel %vm245, %v413, 0
    %417 = vmatprep.subr.bf16.mxu0 %v230
    %418 = vmatpush1.bf16.msra.mxu0 %v229
    %419 = vmatprep.subr.bf16.mxu0 %v232
    %420 = vmatpush1.bf16.msra.mxu0 %v231
    %421 = vmatprep.subr.bf16.mxu0 %v234
    %422 = vmatpush1.bf16.msra.mxu0 %v233
    %423 = vmatprep.subr.bf16.mxu0 %v236
    %424 = vmatpush1.bf16.msra.mxu0 %v235
    %425 = vmatprep.subr.bf16.mxu0 0
    %426 = vmatpush1.bf16.msra.mxu0 0
    %427 = vmatprep.subr.bf16.mxu0 0
    %428 = vmatpush1.bf16.msra.mxu0 0
    %429 = vmatprep.subr.bf16.mxu0 0
    %430 = vmatpush1.bf16.msra.mxu0 0
    %431 = vmatprep.subr.bf16.mxu0 0
    %432 = vmatpush1.bf16.msra.mxu0 0
    %433 = vmatprep.subr.bf16.mxu0 0
    %434 = vmatpush1.bf16.msra.mxu0 0
    %435 = vmatprep.subr.bf16.mxu0 0
    %436 = vmatpush1.bf16.msra.mxu0 0
    %437 = vmatprep.subr.bf16.mxu0 0
    %438 = vmatpush1.bf16.msra.mxu0 0
    %439 = vmatprep.subr.bf16.mxu0 0
    %440 = vmatpush1.bf16.msra.mxu0 0
    %441 = vmatprep.subr.bf16.mxu0 0
    %442 = vmatpush1.bf16.msra.mxu0 0
    %443 = vmatprep.subr.bf16.mxu0 0
    %444 = vmatpush1.bf16.msra.mxu0 0
    %445 = vmatprep.subr.bf16.mxu0 0
    %446 = vmatpush1.bf16.msra.mxu0 0
    %447 = vmatprep.subr.bf16.mxu0 0
    %448 = vmatpush1.bf16.msra.mxu0 0
    %449 = vmatprep.mubr.bf16.mxu0 0
    %450 = vmatmul.mubr.bf16.gmra.mrb[0].mxu0 %v415
    %v451 = vpop.f32.mrb[0].mxu0
    %v452 = vadd.f32 0.0, %v451
    %v453 = vpop.f32.mrb[0].mxu0
    %v454 = vadd.f32 0.0, %v453
    %v455 = vpop.f32.mrb[0].mxu0
    %v456 = vpop.f32.mrb[0].mxu0
    %457 = vdwg.mxu0
    %v458 = vadd.f32 %v403, %v452
    %v459 = vadd.f32 %v454, %v76
    %v461 = vrot.slane %v459, 6
    %v463 = vsel %vm295, %v458, %v461
    %v464 = vmul.f32 %v463, 0.5
    %v465 = vtanh.pop %v464
    %v466 = vmul.f32 %v465, 0.5
    %v467 = vadd.f32 %v466, 0.5
    %v468 = vtanh.pop %v463
    %v469 = vmul.f32 %v467, %v396
    %471 = vrot.lane.b32.xlu0 %v468, 64
    %v472 = vpop.permute.xlu0 %471
    %v474 = vmul.f32 %v467, %v472
    %476 = vrot.lane.b32.xlu0 %v474, 32
    %v477 = vpop.permute.xlu0 %476
    %v479 = vadd.f32 %v469, %v477
    %v480 = vtanh.pop %v479
    %482 = vrot.lane.b32.xlu0 %v480, 64
    %v483 = vpop.permute.xlu0 %482
    %v485 = vmul.f32 %v467, %v483
    %v486 = vld [vmem:[#allocation2 + $0x8] sm:$0x3]
    %488 = vrot.lane.b32.xlu0 %v485, 32
    %v489 = vpop.permute.xlu0 %488
    %v491 = vrot.slane %v485, 2
    %492 = vrot.lane.b32.xlu0 %v491, 64
    %v493 = vpop.permute.xlu0 %492
    %v495 = vsel %vm115, %v489, %v493
    %v496 = vpack.c.bf16 %v495, %v495
    %v498 = vsel %vm245, %v496, 0
    %500 = vmatprep.subr.bf16.mxu0 %v230
    %501 = vmatpush1.bf16.msra.mxu0 %v229
    %502 = vmatprep.subr.bf16.mxu0 %v232
    %503 = vmatpush1.bf16.msra.mxu0 %v231
    %504 = vmatprep.subr.bf16.mxu0 %v234
    %505 = vmatpush1.bf16.msra.mxu0 %v233
    %506 = vmatprep.subr.bf16.mxu0 %v236
    %507 = vmatpush1.bf16.msra.mxu0 %v235
    %508 = vmatprep.subr.bf16.mxu0 0
    %509 = vmatpush1.bf16.msra.mxu0 0
    %510 = vmatprep.subr.bf16.mxu0 0
    %511 = vmatpush1.bf16.msra.mxu0 0
    %512 = vmatprep.subr.bf16.mxu0 0
    %513 = vmatpush1.bf16.msra.mxu0 0
    %514 = vmatprep.subr.bf16.mxu0 0
    %515 = vmatpush1.bf16.msra.mxu0 0
    %516 = vmatprep.subr.bf16.mxu0 0
    %517 = vmatpush1.bf16.msra.mxu0 0
    %518 = vmatprep.subr.bf16.mxu0 0
    %519 = vmatpush1.bf16.msra.mxu0 0
    %520 = vmatprep.subr.bf16.mxu0 0
    %521 = vmatpush1.bf16.msra.mxu0 0
    %522 = vmatprep.subr.bf16.mxu0 0
    %523 = vmatpush1.bf16.msra.mxu0 0
    %524 = vmatprep.subr.bf16.mxu0 0
    %525 = vmatpush1.bf16.msra.mxu0 0
    %526 = vmatprep.subr.bf16.mxu0 0
    %527 = vmatpush1.bf16.msra.mxu0 0
    %528 = vmatprep.subr.bf16.mxu0 0
    %529 = vmatpush1.bf16.msra.mxu0 0
    %530 = vmatprep.subr.bf16.mxu0 0
    %531 = vmatpush1.bf16.msra.mxu0 0
    %532 = vmatprep.mubr.bf16.mxu0 0
    %533 = vmatmul.mubr.bf16.gmra.mrb[0].mxu0 %v498
    %v534 = vpop.f32.mrb[0].mxu0
    %v535 = vadd.f32 0.0, %v534
    %v536 = vpop.f32.mrb[0].mxu0
    %v537 = vadd.f32 0.0, %v536
    %v538 = vpop.f32.mrb[0].mxu0
    %v539 = vpop.f32.mrb[0].mxu0
    %540 = vdwg.mxu0
    %v541 = vadd.f32 %v486, %v535
    %v542 = vadd.f32 %v537, %v76
    %v544 = vrot.slane %v542, 6
    %v546 = vsel %vm295, %v541, %v544
    %v547 = vmul.f32 %v546, 0.5
    %v548 = vtanh.pop %v547
    %v549 = vmul.f32 %v548, 0.5
    %v550 = vadd.f32 %v549, 0.5
    %v551 = vtanh.pop %v546
    %v552 = vmul.f32 %v550, %v479
    %554 = vrot.lane.b32.xlu0 %v551, 64
    %v555 = vpop.permute.xlu0 %554
    %v557 = vmul.f32 %v550, %v555
    %559 = vrot.lane.b32.xlu0 %v557, 32
    %v560 = vpop.permute.xlu0 %559
    %v562 = vadd.f32 %v552, %v560
    %v563 = vtanh.pop %v562
    %565 = vrot.lane.b32.xlu0 %v563, 64
    %v566 = vpop.permute.xlu0 %565
    %v568 = vmul.f32 %v550, %v566
    %v569 = vld [vmem:[#allocation2 + $0xa] sm:$0x3]
    %571 = vrot.lane.b32.xlu0 %v568, 32
    %v572 = vpop.permute.xlu0 %571
    %v574 = vrot.slane %v568, 2
    %575 = vrot.lane.b32.xlu0 %v574, 64
    %v576 = vpop.permute.xlu0 %575
    %v578 = vsel %vm115, %v572, %v576
    %v579 = vpack.c.bf16 %v578, %v578
    %v581 = vsel %vm245, %v579, 0
    %583 = vmatprep.subr.bf16.mxu0 %v230
    %584 = vmatpush1.bf16.msra.mxu0 %v229
    %585 = vmatprep.subr.bf16.mxu0 %v232
    %586 = vmatpush1.bf16.msra.mxu0 %v231
    %587 = vmatprep.subr.bf16.mxu0 %v234
    %588 = vmatpush1.bf16.msra.mxu0 %v233
    %589 = vmatprep.subr.bf16.mxu0 %v236
    %590 = vmatpush1.bf16.msra.mxu0 %v235
    %591 = vmatprep.subr.bf16.mxu0 0
    %592 = vmatpush1.bf16.msra.mxu0 0
    %593 = vmatprep.subr.bf16.mxu0 0
    %594 = vmatpush1.bf16.msra.mxu0 0
    %595 = vmatprep.subr.bf16.mxu0 0
    %596 = vmatpush1.bf16.msra.mxu0 0
    %597 = vmatprep.subr.bf16.mxu0 0
    %598 = vmatpush1.bf16.msra.mxu0 0
    %599 = vmatprep.subr.bf16.mxu0 0
    %600 = vmatpush1.bf16.msra.mxu0 0
    %601 = vmatprep.subr.bf16.mxu0 0
    %602 = vmatpush1.bf16.msra.mxu0 0
    %603 = vmatprep.subr.bf16.mxu0 0
    %604 = vmatpush1.bf16.msra.mxu0 0
    %605 = vmatprep.subr.bf16.mxu0 0
    %606 = vmatpush1.bf16.msra.mxu0 0
    %607 = vmatprep.subr.bf16.mxu0 0
    %608 = vmatpush1.bf16.msra.mxu0 0
    %609 = vmatprep.subr.bf16.mxu0 0
    %610 = vmatpush1.bf16.msra.mxu0 0
    %611 = vmatprep.subr.bf16.mxu0 0
    %612 = vmatpush1.bf16.msra.mxu0 0
    %613 = vmatprep.subr.bf16.mxu0 0
    %614 = vmatpush1.bf16.msra.mxu0 0
    %615 = vmatprep.mubr.bf16.mxu0 0
    %616 = vmatmul.mubr.bf16.gmra.mrb[0].mxu0 %v581
    %v617 = vpop.f32.mrb[0].mxu0
    %v618 = vadd.f32 0.0, %v617
    %v619 = vpop.f32.mrb[0].mxu0
    %v620 = vadd.f32 0.0, %v619
    %v621 = vpop.f32.mrb[0].mxu0
    %v622 = vpop.f32.mrb[0].mxu0
    %623 = vdwg.mxu0
    %v624 = vadd.f32 %v569, %v618
    %v625 = vadd.f32 %v620, %v76
    %v627 = vrot.slane %v625, 6
    %v629 = vsel %vm295, %v624, %v627
    %v630 = vmul.f32 %v629, 0.5
    %v631 = vtanh.pop %v630
    %v632 = vmul.f32 %v631, 0.5
    %v633 = vadd.f32 %v632, 0.5
    %v634 = vtanh.pop %v629
    %v635 = vmul.f32 %v633, %v562
    %637 = vrot.lane.b32.xlu0 %v634, 64
    %v638 = vpop.permute.xlu0 %637
    %v640 = vmul.f32 %v633, %v638
    %642 = vrot.lane.b32.xlu0 %v640, 32
    %v643 = vpop.permute.xlu0 %642
    %v645 = vadd.f32 %v635, %v643
    %v646 = vtanh.pop %v645
    %648 = vrot.lane.b32.xlu0 %v646, 64
    %v649 = vpop.permute.xlu0 %648
    %v651 = vmul.f32 %v633, %v649
    %v652 = vld [vmem:[#allocation2 + $0xc] sm:$0x3]
    %654 = vrot.lane.b32.xlu0 %v651, 32
    %v655 = vpop.permute.xlu0 %654
    %v657 = vrot.slane %v651, 2
    %658 = vrot.lane.b32.xlu0 %v657, 64
    %v659 = vpop.permute.xlu0 %658
    %v661 = vsel %vm115, %v655, %v659
    %v662 = vpack.c.bf16 %v661, %v661
    %v664 = vsel %vm245, %v662, 0
    %666 = vmatprep.subr.bf16.mxu0 %v230
    %667 = vmatpush1.bf16.msra.mxu0 %v229
    %668 = vmatprep.subr.bf16.mxu0 %v232
    %669 = vmatpush1.bf16.msra.mxu0 %v231
    %670 = vmatprep.subr.bf16.mxu0 %v234
    %671 = vmatpush1.bf16.msra.mxu0 %v233
    %672 = vmatprep.subr.bf16.mxu0 %v236
    %673 = vmatpush1.bf16.msra.mxu0 %v235
    %674 = vmatprep.subr.bf16.mxu0 0
    %675 = vmatpush1.bf16.msra.mxu0 0
    %676 = vmatprep.subr.bf16.mxu0 0
    %677 = vmatpush1.bf16.msra.mxu0 0
    %678 = vmatprep.subr.bf16.mxu0 0
    %679 = vmatpush1.bf16.msra.mxu0 0
    %680 = vmatprep.subr.bf16.mxu0 0
    %681 = vmatpush1.bf16.msra.mxu0 0
    %682 = vmatprep.subr.bf16.mxu0 0
    %683 = vmatpush1.bf16.msra.mxu0 0
    %684 = vmatprep.subr.bf16.mxu0 0
    %685 = vmatpush1.bf16.msra.mxu0 0
    %686 = vmatprep.subr.bf16.mxu0 0
    %687 = vmatpush1.bf16.msra.mxu0 0
    %688 = vmatprep.subr.bf16.mxu0 0
    %689 = vmatpush1.bf16.msra.mxu0 0
    %690 = vmatprep.subr.bf16.mxu0 0
    %691 = vmatpush1.bf16.msra.mxu0 0
    %692 = vmatprep.subr.bf16.mxu0 0
    %693 = vmatpush1.bf16.msra.mxu0 0
    %694 = vmatprep.subr.bf16.mxu0 0
    %695 = vmatpush1.bf16.msra.mxu0 0
    %696 = vmatprep.subr.bf16.mxu0 0
    %697 = vmatpush1.bf16.msra.mxu0 0
    %698 = vmatprep.mubr.bf16.mxu0 0
    %699 = vmatmul.mubr.bf16.gmra.mrb[0].mxu0 %v664
    %v700 = vpop.f32.mrb[0].mxu0
    %v701 = vadd.f32 0.0, %v700
    %v702 = vpop.f32.mrb[0].mxu0
    %v703 = vadd.f32 0.0, %v702
    %v704 = vpop.f32.mrb[0].mxu0
    %v705 = vpop.f32.mrb[0].mxu0
    %706 = vdwg.mxu0
    %v707 = vadd.f32 %v652, %v701
    %v708 = vadd.f32 %v703, %v76
    %v710 = vrot.slane %v708, 6
    %v712 = vsel %vm295, %v707, %v710
    %v713 = vmul.f32 %v712, 0.5
    %v714 = vtanh.pop %v713
    %v715 = vmul.f32 %v714, 0.5
    %v716 = vadd.f32 %v715, 0.5
    %v717 = vtanh.pop %v712
    %v718 = vmul.f32 %v716, %v645
    %720 = vrot.lane.b32.xlu0 %v717, 64
    %v721 = vpop.permute.xlu0 %720
    %v723 = vmul.f32 %v716, %v721
    %725 = vrot.lane.b32.xlu0 %v723, 32
    %v726 = vpop.permute.xlu0 %725
    %v728 = vadd.f32 %v718, %v726
    %v729 = vtanh.pop %v728
    %731 = vrot.lane.b32.xlu0 %v729, 64
    %v732 = vpop.permute.xlu0 %731
    %v734 = vmul.f32 %v716, %v732
    %v735 = vld [vmem:[#allocation2 + $0xe] sm:$0x3]
    %737 = vrot.lane.b32.xlu0 %v734, 32
    %v738 = vpop.permute.xlu0 %737
    %v740 = vrot.slane %v734, 2
    %741 = vrot.lane.b32.xlu0 %v740, 64
    %v742 = vpop.permute.xlu0 %741
    %v744 = vsel %vm115, %v738, %v742
    %v745 = vpack.c.bf16 %v744, %v744
    %v747 = vsel %vm245, %v745, 0
    %749 = vmatprep.subr.bf16.mxu0 %v230
    %750 = vmatpush1.bf16.msra.mxu0 %v229
    %751 = vmatprep.subr.bf16.mxu0 %v232
    %752 = vmatpush1.bf16.msra.mxu0 %v231
    %753 = vmatprep.subr.bf16.mxu0 %v234
    %754 = vmatpush1.bf16.msra.mxu0 %v233
    %755 = vmatprep.subr.bf16.mxu0 %v236
    %756 = vmatpush1.bf16.msra.mxu0 %v235
    %757 = vmatprep.subr.bf16.mxu0 0
    %758 = vmatpush1.bf16.msra.mxu0 0
    %759 = vmatprep.subr.bf16.mxu0 0
    %760 = vmatpush1.bf16.msra.mxu0 0
    %761 = vmatprep.subr.bf16.mxu0 0
    %762 = vmatpush1.bf16.msra.mxu0 0
    %763 = vmatprep.subr.bf16.mxu0 0
    %764 = vmatpush1.bf16.msra.mxu0 0
    %765 = vmatprep.subr.bf16.mxu0 0
    %766 = vmatpush1.bf16.msra.mxu0 0
    %767 = vmatprep.subr.bf16.mxu0 0
    %768 = vmatpush1.bf16.msra.mxu0 0
    %769 = vmatprep.subr.bf16.mxu0 0
    %770 = vmatpush1.bf16.msra.mxu0 0
    %771 = vmatprep.subr.bf16.mxu0 0
    %772 = vmatpush1.bf16.msra.mxu0 0
    %773 = vmatprep.subr.bf16.mxu0 0
    %774 = vmatpush1.bf16.msra.mxu0 0
    %775 = vmatprep.subr.bf16.mxu0 0
    %776 = vmatpush1.bf16.msra.mxu0 0
    %777 = vmatprep.subr.bf16.mxu0 0
    %778 = vmatpush1.bf16.msra.mxu0 0
    %779 = vmatprep.subr.bf16.mxu0 0
    %780 = vmatpush1.bf16.msra.mxu0 0
    %781 = vmatprep.mubr.bf16.mxu0 0
    %782 = vmatmul.mubr.bf16.gmra.mrb[0].mxu0 %v747
    %v783 = vpop.f32.mrb[0].mxu0
    %v784 = vadd.f32 0.0, %v783
    %v785 = vpop.f32.mrb[0].mxu0
    %v786 = vadd.f32 0.0, %v785
    %v787 = vpop.f32.mrb[0].mxu0
    %v788 = vpop.f32.mrb[0].mxu0
    %789 = vdwg.mxu0
    %v790 = vadd.f32 %v735, %v784
    %v791 = vadd.f32 %v786, %v76
    %v793 = vrot.slane %v791, 6
    %v795 = vsel %vm295, %v790, %v793
    %v796 = vmul.f32 %v795, 0.5
    %v797 = vtanh.pop %v796
    %v798 = vmul.f32 %v797, 0.5
    %v799 = vadd.f32 %v798, 0.5
    %v800 = vtanh.pop %v795
    %v801 = vmul.f32 %v799, %v728
    %803 = vrot.lane.b32.xlu0 %v800, 64
    %v804 = vpop.permute.xlu0 %803
    %v806 = vmul.f32 %v799, %v804
    %808 = vrot.lane.b32.xlu0 %v806, 32
    %v809 = vpop.permute.xlu0 %808
    %v811 = vadd.f32 %v801, %v809
    %v812 = vtanh.pop %v811
    %814 = vrot.lane.b32.xlu0 %v812, 64
    %v815 = vpop.permute.xlu0 %814
    %v817 = vmul.f32 %v799, %v815
    %v818 = vld [vmem:[#allocation2 + $0x10] sm:$0x3]
    %820 = vrot.lane.b32.xlu0 %v817, 32
    %v821 = vpop.permute.xlu0 %820
    %v823 = vrot.slane %v817, 2
    %824 = vrot.lane.b32.xlu0 %v823, 64
    %v825 = vpop.permute.xlu0 %824
    %v827 = vsel %vm115, %v821, %v825
    %v828 = vpack.c.bf16 %v827, %v827
    %v830 = vsel %vm245, %v828, 0
    %832 = vmatprep.subr.bf16.mxu0 %v230
    %833 = vmatpush1.bf16.msra.mxu0 %v229
    %834 = vmatprep.subr.bf16.mxu0 %v232
    %835 = vmatpush1.bf16.msra.mxu0 %v231
    %836 = vmatprep.subr.bf16.mxu0 %v234
    %837 = vmatpush1.bf16.msra.mxu0 %v233
    %838 = vmatprep.subr.bf16.mxu0 %v236
    %839 = vmatpush1.bf16.msra.mxu0 %v235
    %840 = vmatprep.subr.bf16.mxu0 0
    %841 = vmatpush1.bf16.msra.mxu0 0
    %842 = vmatprep.subr.bf16.mxu0 0
    %843 = vmatpush1.bf16.msra.mxu0 0
    %844 = vmatprep.subr.bf16.mxu0 0
    %845 = vmatpush1.bf16.msra.mxu0 0
    %846 = vmatprep.subr.bf16.mxu0 0
    %847 = vmatpush1.bf16.msra.mxu0 0
    %848 = vmatprep.subr.bf16.mxu0 0
    %849 = vmatpush1.bf16.msra.mxu0 0
    %850 = vmatprep.subr.bf16.mxu0 0
    %851 = vmatpush1.bf16.msra.mxu0 0
    %852 = vmatprep.subr.bf16.mxu0 0
    %853 = vmatpush1.bf16.msra.mxu0 0
    %854 = vmatprep.subr.bf16.mxu0 0
    %855 = vmatpush1.bf16.msra.mxu0 0
    %856 = vmatprep.subr.bf16.mxu0 0
    %857 = vmatpush1.bf16.msra.mxu0 0
    %858 = vmatprep.subr.bf16.mxu0 0
    %859 = vmatpush1.bf16.msra.mxu0 0
    %860 = vmatprep.subr.bf16.mxu0 0
    %861 = vmatpush1.bf16.msra.mxu0 0
    %862 = vmatprep.subr.bf16.mxu0 0
    %863 = vmatpush1.bf16.msra.mxu0 0
    %864 = vmatprep.mubr.bf16.mxu0 0
    %865 = vmatmul.mubr.bf16.gmra.mrb[0].mxu0 %v830
    %v866 = vpop.f32.mrb[0].mxu0
    %v867 = vadd.f32 0.0, %v866
    %v868 = vpop.f32.mrb[0].mxu0
    %v869 = vadd.f32 0.0, %v868
    %v870 = vpop.f32.mrb[0].mxu0
    %v871 = vpop.f32.mrb[0].mxu0
    %872 = vdwg.mxu0
    %v873 = vadd.f32 %v818, %v867
    %v874 = vadd.f32 %v869, %v76
    %v876 = vrot.slane %v874, 6
    %v878 = vsel %vm295, %v873, %v876
    %v879 = vmul.f32 %v878, 0.5
    %v880 = vtanh.pop %v879
    %v881 = vmul.f32 %v880, 0.5
    %v882 = vadd.f32 %v881, 0.5
    %v883 = vtanh.pop %v878
    %v884 = vmul.f32 %v882, %v811
    %886 = vrot.lane.b32.xlu0 %v883, 64
    %v887 = vpop.permute.xlu0 %886
    %v889 = vmul.f32 %v882, %v887
    %891 = vrot.lane.b32.xlu0 %v889, 32
    %v892 = vpop.permute.xlu0 %891
    %v894 = vadd.f32 %v884, %v892
    %v895 = vtanh.pop %v894
    %897 = vrot.lane.b32.xlu0 %v895, 64
    %v898 = vpop.permute.xlu0 %897
    %v900 = vmul.f32 %v882, %v898
    %v901 = vld [vmem:[#allocation2 + $0x12] sm:$0x3]
    %903 = vrot.lane.b32.xlu0 %v900, 32
    %v904 = vpop.permute.xlu0 %903
    %v906 = vrot.slane %v900, 2
    %907 = vrot.lane.b32.xlu0 %v906, 64
    %v908 = vpop.permute.xlu0 %907
    %v910 = vsel %vm115, %v904, %v908
    %v911 = vpack.c.bf16 %v910, %v910
    %v913 = vsel %vm245, %v911, 0
    %915 = vmatprep.subr.bf16.mxu0 %v230
    %916 = vmatpush1.bf16.msra.mxu0 %v229
    %917 = vmatprep.subr.bf16.mxu0 %v232
    %918 = vmatpush1.bf16.msra.mxu0 %v231
    %919 = vmatprep.subr.bf16.mxu0 %v234
    %920 = vmatpush1.bf16.msra.mxu0 %v233
    %921 = vmatprep.subr.bf16.mxu0 %v236
    %922 = vmatpush1.bf16.msra.mxu0 %v235
    %923 = vmatprep.subr.bf16.mxu0 0
    %924 = vmatpush1.bf16.msra.mxu0 0
    %925 = vmatprep.subr.bf16.mxu0 0
    %926 = vmatpush1.bf16.msra.mxu0 0
    %927 = vmatprep.subr.bf16.mxu0 0
    %928 = vmatpush1.bf16.msra.mxu0 0
    %929 = vmatprep.subr.bf16.mxu0 0
    %930 = vmatpush1.bf16.msra.mxu0 0
    %931 = vmatprep.subr.bf16.mxu0 0
    %932 = vmatpush1.bf16.msra.mxu0 0
    %933 = vmatprep.subr.bf16.mxu0 0
    %934 = vmatpush1.bf16.msra.mxu0 0
    %935 = vmatprep.subr.bf16.mxu0 0
    %936 = vmatpush1.bf16.msra.mxu0 0
    %937 = vmatprep.subr.bf16.mxu0 0
    %938 = vmatpush1.bf16.msra.mxu0 0
    %939 = vmatprep.subr.bf16.mxu0 0
    %940 = vmatpush1.bf16.msra.mxu0 0
    %941 = vmatprep.subr.bf16.mxu0 0
    %942 = vmatpush1.bf16.msra.mxu0 0
    %943 = vmatprep.subr.bf16.mxu0 0
    %944 = vmatpush1.bf16.msra.mxu0 0
    %945 = vmatprep.subr.bf16.mxu0 0
    %946 = vmatpush1.bf16.msra.mxu0 0
    %947 = vmatprep.mubr.bf16.mxu0 0
    %948 = vmatmul.mubr.bf16.gmra.mrb[0].mxu0 %v913
    %v949 = vpop.f32.mrb[0].mxu0
    %v950 = vadd.f32 0.0, %v949
    %v951 = vpop.f32.mrb[0].mxu0
    %v952 = vadd.f32 0.0, %v951
    %v953 = vpop.f32.mrb[0].mxu0
    %v954 = vpop.f32.mrb[0].mxu0
    %955 = vdwg.mxu0
    %v956 = vadd.f32 %v901, %v950
    %v957 = vadd.f32 %v952, %v76
    %v959 = vrot.slane %v957, 6
    %v961 = vsel %vm295, %v956, %v959
    %v962 = vmul.f32 %v961, 0.5
    %v963 = vtanh.pop %v962
    %v964 = vmul.f32 %v963, 0.5
    %v965 = vadd.f32 %v964, 0.5
    %v966 = vtanh.pop %v961
    %v967 = vmul.f32 %v965, %v894
    %969 = vrot.lane.b32.xlu0 %v966, 64
    %v970 = vpop.permute.xlu0 %969
    %v972 = vmul.f32 %v965, %v970
    %974 = vrot.lane.b32.xlu0 %v972, 32
    %v975 = vpop.permute.xlu0 %974
    %v977 = vadd.f32 %v967, %v975
    %v978 = vtanh.pop %v977
    %980 = vrot.lane.b32.xlu0 %v978, 64
    %v981 = vpop.permute.xlu0 %980
    %v983 = vmul.f32 %v965, %v981
    %v984 = vld [vmem:[#allocation2 + $0x14] sm:$0x3]
    %986 = vrot.lane.b32.xlu0 %v983, 32
    %v987 = vpop.permute.xlu0 %986
    %v989 = vrot.slane %v983, 2
    %990 = vrot.lane.b32.xlu0 %v989, 64
    %v991 = vpop.permute.xlu0 %990
    %v993 = vsel %vm115, %v987, %v991
    %v994 = vpack.c.bf16 %v993, %v993
    %v996 = vsel %vm245, %v994, 0
    %998 = vmatprep.subr.bf16.mxu0 %v230
    %999 = vmatpush1.bf16.msra.mxu0 %v229
    %1000 = vmatprep.subr.bf16.mxu0 %v232
    %1001 = vmatpush1.bf16.msra.mxu0 %v231
    %1002 = vmatprep.subr.bf16.mxu0 %v234
    %1003 = vmatpush1.bf16.msra.mxu0 %v233
    %1004 = vmatprep.subr.bf16.mxu0 %v236
    %1005 = vmatpush1.bf16.msra.mxu0 %v235
    %1006 = vmatprep.subr.bf16.mxu0 0
    %1007 = vmatpush1.bf16.msra.mxu0 0
    %1008 = vmatprep.subr.bf16.mxu0 0
    %1009 = vmatpush1.bf16.msra.mxu0 0
    %1010 = vmatprep.subr.bf16.mxu0 0
    %1011 = vmatpush1.bf16.msra.mxu0 0
    %1012 = vmatprep.subr.bf16.mxu0 0
    %1013 = vmatpush1.bf16.msra.mxu0 0
    %1014 = vmatprep.subr.bf16.mxu0 0
    %1015 = vmatpush1.bf16.msra.mxu0 0
    %1016 = vmatprep.subr.bf16.mxu0 0
    %1017 = vmatpush1.bf16.msra.mxu0 0
    %1018 = vmatprep.subr.bf16.mxu0 0
    %1019 = vmatpush1.bf16.msra.mxu0 0
    %1020 = vmatprep.subr.bf16.mxu0 0
    %1021 = vmatpush1.bf16.msra.mxu0 0
    %1022 = vmatprep.subr.bf16.mxu0 0
    %1023 = vmatpush1.bf16.msra.mxu0 0
    %1024 = vmatprep.subr.bf16.mxu0 0
    %1025 = vmatpush1.bf16.msra.mxu0 0
    %1026 = vmatprep.subr.bf16.mxu0 0
    %1027 = vmatpush1.bf16.msra.mxu0 0
    %1028 = vmatprep.subr.bf16.mxu0 0
    %1029 = vmatpush1.bf16.msra.mxu0 0
    %1030 = vmatprep.mubr.bf16.mxu0 0
    %1031 = vmatmul.mubr.bf16.gmra.mrb[0].mxu0 %v996
    %v1032 = vpop.f32.mrb[0].mxu0
    %v1033 = vadd.f32 0.0, %v1032
    %v1034 = vpop.f32.mrb[0].mxu0
    %v1035 = vadd.f32 0.0, %v1034
    %v1036 = vpop.f32.mrb[0].mxu0
    %v1037 = vpop.f32.mrb[0].mxu0
    %1038 = vdwg.mxu0
    %v1039 = vadd.f32 %v984, %v1033
    %v1040 = vadd.f32 %v1035, %v76
    %v1042 = vrot.slane %v1040, 6
    %v1044 = vsel %vm295, %v1039, %v1042
    %v1045 = vmul.f32 %v1044, 0.5
    %v1046 = vtanh.pop %v1045
    %v1047 = vmul.f32 %v1046, 0.5
    %v1048 = vadd.f32 %v1047, 0.5
    %v1049 = vtanh.pop %v1044
    %v1050 = vmul.f32 %v1048, %v977
    %1052 = vrot.lane.b32.xlu0 %v1049, 64
    %v1053 = vpop.permute.xlu0 %1052
    %v1055 = vmul.f32 %v1048, %v1053
    %1057 = vrot.lane.b32.xlu0 %v1055, 32
    %v1058 = vpop.permute.xlu0 %1057
    %v1060 = vadd.f32 %v1050, %v1058
    %v1061 = vtanh.pop %v1060
    %1063 = vrot.lane.b32.xlu0 %v1061, 64
    %v1064 = vpop.permute.xlu0 %1063
    %v1066 = vmul.f32 %v1048, %v1064
    %v1067 = vld [vmem:[#allocation2 + $0x16] sm:$0x3]
    %1069 = vrot.lane.b32.xlu0 %v1066, 32
    %v1070 = vpop.permute.xlu0 %1069
    %v1072 = vrot.slane %v1066, 2
    %1073 = vrot.lane.b32.xlu0 %v1072, 64
    %v1074 = vpop.permute.xlu0 %1073
    %v1076 = vsel %vm115, %v1070, %v1074
    %v1077 = vpack.c.bf16 %v1076, %v1076
    %v1079 = vsel %vm245, %v1077, 0
    %1081 = vmatprep.subr.bf16.mxu0 %v230
    %1082 = vmatpush1.bf16.msra.mxu0 %v229
    %1083 = vmatprep.subr.bf16.mxu0 %v232
    %1084 = vmatpush1.bf16.msra.mxu0 %v231
    %1085 = vmatprep.subr.bf16.mxu0 %v234
    %1086 = vmatpush1.bf16.msra.mxu0 %v233
    %1087 = vmatprep.subr.bf16.mxu0 %v236
    %1088 = vmatpush1.bf16.msra.mxu0 %v235
    %1089 = vmatprep.subr.bf16.mxu0 0
    %1090 = vmatpush1.bf16.msra.mxu0 0
    %1091 = vmatprep.subr.bf16.mxu0 0
    %1092 = vmatpush1.bf16.msra.mxu0 0
    %1093 = vmatprep.subr.bf16.mxu0 0
    %1094 = vmatpush1.bf16.msra.mxu0 0
    %1095 = vmatprep.subr.bf16.mxu0 0
    %1096 = vmatpush1.bf16.msra.mxu0 0
    %1097 = vmatprep.subr.bf16.mxu0 0
    %1098 = vmatpush1.bf16.msra.mxu0 0
    %1099 = vmatprep.subr.bf16.mxu0 0
    %1100 = vmatpush1.bf16.msra.mxu0 0
    %1101 = vmatprep.subr.bf16.mxu0 0
    %1102 = vmatpush1.bf16.msra.mxu0 0
    %1103 = vmatprep.subr.bf16.mxu0 0
    %1104 = vmatpush1.bf16.msra.mxu0 0
    %1105 = vmatprep.subr.bf16.mxu0 0
    %1106 = vmatpush1.bf16.msra.mxu0 0
    %1107 = vmatprep.subr.bf16.mxu0 0
    %1108 = vmatpush1.bf16.msra.mxu0 0
    %1109 = vmatprep.subr.bf16.mxu0 0
    %1110 = vmatpush1.bf16.msra.mxu0 0
    %1111 = vmatprep.subr.bf16.mxu0 0
    %1112 = vmatpush1.bf16.msra.mxu0 0
    %1113 = vmatprep.mubr.bf16.mxu0 0
    %1114 = vmatmul.mubr.bf16.gmra.mrb[0].mxu0 %v1079
    %v1115 = vpop.f32.mrb[0].mxu0
    %v1116 = vadd.f32 0.0, %v1115
    %v1117 = vpop.f32.mrb[0].mxu0
    %v1118 = vadd.f32 0.0, %v1117
    %v1119 = vpop.f32.mrb[0].mxu0
    %v1120 = vpop.f32.mrb[0].mxu0
    %1121 = vdwg.mxu0
    %v1122 = vadd.f32 %v1067, %v1116
    %v1123 = vadd.f32 %v1118, %v76
    %v1125 = vrot.slane %v1123, 6
    %v1127 = vsel %vm295, %v1122, %v1125
    %v1128 = vmul.f32 %v1127, 0.5
    %v1129 = vtanh.pop %v1128
    %v1130 = vmul.f32 %v1129, 0.5
    %v1131 = vadd.f32 %v1130, 0.5
    %v1132 = vtanh.pop %v1127
    %v1133 = vmul.f32 %v1131, %v1060
    %1135 = vrot.lane.b32.xlu0 %v1132, 64
    %v1136 = vpop.permute.xlu0 %1135
    %v1138 = vmul.f32 %v1131, %v1136
    %1140 = vrot.lane.b32.xlu0 %v1138, 32
    %v1141 = vpop.permute.xlu0 %1140
    %v1143 = vadd.f32 %v1133, %v1141
    %v1144 = vtanh.pop %v1143
    %1146 = vrot.lane.b32.xlu0 %v1144, 64
    %v1147 = vpop.permute.xlu0 %1146
    %v1149 = vmul.f32 %v1131, %v1147
    %v1150 = vld [vmem:[#allocation2 + $0x18] sm:$0x3]
    %1152 = vrot.lane.b32.xlu0 %v1149, 32
    %v1153 = vpop.permute.xlu0 %1152
    %v1155 = vrot.slane %v1149, 2
    %1156 = vrot.lane.b32.xlu0 %v1155, 64
    %v1157 = vpop.permute.xlu0 %1156
    %v1159 = vsel %vm115, %v1153, %v1157
    %v1160 = vpack.c.bf16 %v1159, %v1159
    %v1162 = vsel %vm245, %v1160, 0
    %1164 = vmatprep.subr.bf16.mxu0 %v230
    %1165 = vmatpush1.bf16.msra.mxu0 %v229
    %1166 = vmatprep.subr.bf16.mxu0 %v232
    %1167 = vmatpush1.bf16.msra.mxu0 %v231
    %1168 = vmatprep.subr.bf16.mxu0 %v234
    %1169 = vmatpush1.bf16.msra.mxu0 %v233
    %1170 = vmatprep.subr.bf16.mxu0 %v236
    %1171 = vmatpush1.bf16.msra.mxu0 %v235
    %1172 = vmatprep.subr.bf16.mxu0 0
    %1173 = vmatpush1.bf16.msra.mxu0 0
    %1174 = vmatprep.subr.bf16.mxu0 0
    %1175 = vmatpush1.bf16.msra.mxu0 0
    %1176 = vmatprep.subr.bf16.mxu0 0
    %1177 = vmatpush1.bf16.msra.mxu0 0
    %1178 = vmatprep.subr.bf16.mxu0 0
    %1179 = vmatpush1.bf16.msra.mxu0 0
    %1180 = vmatprep.subr.bf16.mxu0 0
    %1181 = vmatpush1.bf16.msra.mxu0 0
    %1182 = vmatprep.subr.bf16.mxu0 0
    %1183 = vmatpush1.bf16.msra.mxu0 0
    %1184 = vmatprep.subr.bf16.mxu0 0
    %1185 = vmatpush1.bf16.msra.mxu0 0
    %1186 = vmatprep.subr.bf16.mxu0 0
    %1187 = vmatpush1.bf16.msra.mxu0 0
    %1188 = vmatprep.subr.bf16.mxu0 0
    %1189 = vmatpush1.bf16.msra.mxu0 0
    %1190 = vmatprep.subr.bf16.mxu0 0
    %1191 = vmatpush1.bf16.msra.mxu0 0
    %1192 = vmatprep.subr.bf16.mxu0 0
    %1193 = vmatpush1.bf16.msra.mxu0 0
    %1194 = vmatprep.subr.bf16.mxu0 0
    %1195 = vmatpush1.bf16.msra.mxu0 0
    %1196 = vmatprep.mubr.bf16.mxu0 0
    %1197 = vmatmul.mubr.bf16.gmra.mrb[0].mxu0 %v1162
    %v1198 = vpop.f32.mrb[0].mxu0
    %v1199 = vadd.f32 0.0, %v1198
    %v1200 = vpop.f32.mrb[0].mxu0
    %v1201 = vadd.f32 0.0, %v1200
    %v1202 = vpop.f32.mrb[0].mxu0
    %v1203 = vpop.f32.mrb[0].mxu0
    %1204 = vdwg.mxu0
    %v1205 = vadd.f32 %v1150, %v1199
    %v1206 = vadd.f32 %v1201, %v76
    %v1208 = vrot.slane %v1206, 6
    %v1210 = vsel %vm295, %v1205, %v1208
    %v1211 = vmul.f32 %v1210, 0.5
    %v1212 = vtanh.pop %v1211
    %v1213 = vmul.f32 %v1212, 0.5
    %v1214 = vadd.f32 %v1213, 0.5
    %v1215 = vtanh.pop %v1210
    %v1216 = vmul.f32 %v1214, %v1143
    %1218 = vrot.lane.b32.xlu0 %v1215, 64
    %v1219 = vpop.permute.xlu0 %1218
    %v1221 = vmul.f32 %v1214, %v1219
    %1223 = vrot.lane.b32.xlu0 %v1221, 32
    %v1224 = vpop.permute.xlu0 %1223
    %v1226 = vadd.f32 %v1216, %v1224
    %v1227 = vtanh.pop %v1226
    %1229 = vrot.lane.b32.xlu0 %v1227, 64
    %v1230 = vpop.permute.xlu0 %1229
    %v1232 = vmul.f32 %v1214, %v1230
    %v1233 = vld [vmem:[#allocation2 + $0x1a] sm:$0x3]
    %1235 = vrot.lane.b32.xlu0 %v1232, 32
    %v1236 = vpop.permute.xlu0 %1235
    %v1238 = vrot.slane %v1232, 2
    %1239 = vrot.lane.b32.xlu0 %v1238, 64
    %v1240 = vpop.permute.xlu0 %1239
    %v1242 = vsel %vm115, %v1236, %v1240
    %v1243 = vpack.c.bf16 %v1242, %v1242
    %v1245 = vsel %vm245, %v1243, 0
    %1247 = vmatprep.subr.bf16.mxu0 %v230
    %1248 = vmatpush1.bf16.msra.mxu0 %v229
    %1249 = vmatprep.subr.bf16.mxu0 %v232
    %1250 = vmatpush1.bf16.msra.mxu0 %v231
    %1251 = vmatprep.subr.bf16.mxu0 %v234
    %1252 = vmatpush1.bf16.msra.mxu0 %v233
    %1253 = vmatprep.subr.bf16.mxu0 %v236
    %1254 = vmatpush1.bf16.msra.mxu0 %v235
    %1255 = vmatprep.subr.bf16.mxu0 0
    %1256 = vmatpush1.bf16.msra.mxu0 0
    %1257 = vmatprep.subr.bf16.mxu0 0
    %1258 = vmatpush1.bf16.msra.mxu0 0
    %1259 = vmatprep.subr.bf16.mxu0 0
    %1260 = vmatpush1.bf16.msra.mxu0 0
    %1261 = vmatprep.subr.bf16.mxu0 0
    %1262 = vmatpush1.bf16.msra.mxu0 0
    %1263 = vmatprep.subr.bf16.mxu0 0
    %1264 = vmatpush1.bf16.msra.mxu0 0
    %1265 = vmatprep.subr.bf16.mxu0 0
    %1266 = vmatpush1.bf16.msra.mxu0 0
    %1267 = vmatprep.subr.bf16.mxu0 0
    %1268 = vmatpush1.bf16.msra.mxu0 0
    %1269 = vmatprep.subr.bf16.mxu0 0
    %1270 = vmatpush1.bf16.msra.mxu0 0
    %1271 = vmatprep.subr.bf16.mxu0 0
    %1272 = vmatpush1.bf16.msra.mxu0 0
    %1273 = vmatprep.subr.bf16.mxu0 0
    %1274 = vmatpush1.bf16.msra.mxu0 0
    %1275 = vmatprep.subr.bf16.mxu0 0
    %1276 = vmatpush1.bf16.msra.mxu0 0
    %1277 = vmatprep.subr.bf16.mxu0 0
    %1278 = vmatpush1.bf16.msra.mxu0 0
    %1279 = vmatprep.mubr.bf16.mxu0 0
    %1280 = vmatmul.mubr.bf16.gmra.mrb[0].mxu0 %v1245
    %v1281 = vpop.f32.mrb[0].mxu0
    %v1282 = vadd.f32 0.0, %v1281
    %v1283 = vpop.f32.mrb[0].mxu0
    %v1284 = vadd.f32 0.0, %v1283
    %v1285 = vpop.f32.mrb[0].mxu0
    %v1286 = vpop.f32.mrb[0].mxu0
    %1287 = vdwg.mxu0
    %v1288 = vadd.f32 %v1233, %v1282
    %v1289 = vadd.f32 %v1284, %v76
    %v1291 = vrot.slane %v1289, 6
    %v1293 = vsel %vm295, %v1288, %v1291
    %v1294 = vmul.f32 %v1293, 0.5
    %v1295 = vtanh.pop %v1294
    %v1296 = vmul.f32 %v1295, 0.5
    %v1297 = vadd.f32 %v1296, 0.5
    %v1298 = vtanh.pop %v1293
    %v1299 = vmul.f32 %v1297, %v1226
    %1301 = vrot.lane.b32.xlu0 %v1298, 64
    %v1302 = vpop.permute.xlu0 %1301
    %v1304 = vmul.f32 %v1297, %v1302
    %1306 = vrot.lane.b32.xlu0 %v1304, 32
    %v1307 = vpop.permute.xlu0 %1306
    %v1309 = vadd.f32 %v1299, %v1307
    %v1310 = vtanh.pop %v1309
    %1312 = vrot.lane.b32.xlu0 %v1310, 64
    %v1313 = vpop.permute.xlu0 %1312
    %v1315 = vmul.f32 %v1297, %v1313
    %v1316 = vld [vmem:[#allocation2 + $0x1c] sm:$0x3]
    %1318 = vrot.lane.b32.xlu0 %v1315, 32
    %v1319 = vpop.permute.xlu0 %1318
    %v1321 = vrot.slane %v1315, 2
    %1322 = vrot.lane.b32.xlu0 %v1321, 64
    %v1323 = vpop.permute.xlu0 %1322
    %v1325 = vsel %vm115, %v1319, %v1323
    %v1326 = vpack.c.bf16 %v1325, %v1325
    %v1328 = vsel %vm245, %v1326, 0
    %1330 = vmatprep.subr.bf16.mxu0 %v230
    %1331 = vmatpush1.bf16.msra.mxu0 %v229
    %1332 = vmatprep.subr.bf16.mxu0 %v232
    %1333 = vmatpush1.bf16.msra.mxu0 %v231
    %1334 = vmatprep.subr.bf16.mxu0 %v234
    %1335 = vmatpush1.bf16.msra.mxu0 %v233
    %1336 = vmatprep.subr.bf16.mxu0 %v236
    %1337 = vmatpush1.bf16.msra.mxu0 %v235
    %1338 = vmatprep.subr.bf16.mxu0 0
    %1339 = vmatpush1.bf16.msra.mxu0 0
    %1340 = vmatprep.subr.bf16.mxu0 0
    %1341 = vmatpush1.bf16.msra.mxu0 0
    %1342 = vmatprep.subr.bf16.mxu0 0
    %1343 = vmatpush1.bf16.msra.mxu0 0
    %1344 = vmatprep.subr.bf16.mxu0 0
    %1345 = vmatpush1.bf16.msra.mxu0 0
    %1346 = vmatprep.subr.bf16.mxu0 0
    %1347 = vmatpush1.bf16.msra.mxu0 0
    %1348 = vmatprep.subr.bf16.mxu0 0
    %1349 = vmatpush1.bf16.msra.mxu0 0
    %1350 = vmatprep.subr.bf16.mxu0 0
    %1351 = vmatpush1.bf16.msra.mxu0 0
    %1352 = vmatprep.subr.bf16.mxu0 0
    %1353 = vmatpush1.bf16.msra.mxu0 0
    %1354 = vmatprep.subr.bf16.mxu0 0
    %1355 = vmatpush1.bf16.msra.mxu0 0
    %1356 = vmatprep.subr.bf16.mxu0 0
    %1357 = vmatpush1.bf16.msra.mxu0 0
    %1358 = vmatprep.subr.bf16.mxu0 0
    %1359 = vmatpush1.bf16.msra.mxu0 0
    %1360 = vmatprep.subr.bf16.mxu0 0
    %1361 = vmatpush1.bf16.msra.mxu0 0
    %1362 = vmatprep.mubr.bf16.mxu0 0
    %1363 = vmatmul.mubr.bf16.gmra.mrb[0].mxu0 %v1328
    %v1364 = vpop.f32.mrb[0].mxu0
    %v1365 = vadd.f32 0.0, %v1364
    %v1366 = vpop.f32.mrb[0].mxu0
    %v1367 = vadd.f32 0.0, %v1366
    %v1368 = vpop.f32.mrb[0].mxu0
    %v1369 = vpop.f32.mrb[0].mxu0
    %1370 = vdwg.mxu0
    %v1371 = vadd.f32 %v1316, %v1365
    %v1372 = vadd.f32 %v1367, %v76
    %v1374 = vrot.slane %v1372, 6
    %v1376 = vsel %vm295, %v1371, %v1374
    %v1377 = vmul.f32 %v1376, 0.5
    %v1378 = vtanh.pop %v1377
    %v1379 = vmul.f32 %v1378, 0.5
    %v1380 = vadd.f32 %v1379, 0.5
    %v1381 = vtanh.pop %v1376
    %v1382 = vmul.f32 %v1380, %v1309
    %1384 = vrot.lane.b32.xlu0 %v1381, 64
    %v1385 = vpop.permute.xlu0 %1384
    %v1387 = vmul.f32 %v1380, %v1385
    %1389 = vrot.lane.b32.xlu0 %v1387, 32
    %v1390 = vpop.permute.xlu0 %1389
    %v1392 = vadd.f32 %v1382, %v1390
    %v1393 = vtanh.pop %v1392
    %1395 = vrot.lane.b32.xlu0 %v1393, 64
    %v1396 = vpop.permute.xlu0 %1395
    %v1398 = vmul.f32 %v1380, %v1396
    %v1399 = vld [vmem:[#allocation2 + $0x1e] sm:$0x3]
    %1401 = vrot.lane.b32.xlu0 %v1398, 32
    %v1402 = vpop.permute.xlu0 %1401
    %v1404 = vrot.slane %v1398, 2
    %1405 = vrot.lane.b32.xlu0 %v1404, 64
    %v1406 = vpop.permute.xlu0 %1405
    %v1408 = vsel %vm115, %v1402, %v1406
    %v1409 = vpack.c.bf16 %v1408, %v1408
    %v1411 = vsel %vm245, %v1409, 0
    %1413 = vmatprep.subr.bf16.mxu0 %v230
    %1414 = vmatpush1.bf16.msra.mxu0 %v229
    %1415 = vmatprep.subr.bf16.mxu0 %v232
    %1416 = vmatpush1.bf16.msra.mxu0 %v231
    %1417 = vmatprep.subr.bf16.mxu0 %v234
    %1418 = vmatpush1.bf16.msra.mxu0 %v233
    %1419 = vmatprep.subr.bf16.mxu0 %v236
    %1420 = vmatpush1.bf16.msra.mxu0 %v235
    %1421 = vmatprep.subr.bf16.mxu0 0
    %1422 = vmatpush1.bf16.msra.mxu0 0
    %1423 = vmatprep.subr.bf16.mxu0 0
    %1424 = vmatpush1.bf16.msra.mxu0 0
    %1425 = vmatprep.subr.bf16.mxu0 0
    %1426 = vmatpush1.bf16.msra.mxu0 0
    %1427 = vmatprep.subr.bf16.mxu0 0
    %1428 = vmatpush1.bf16.msra.mxu0 0
    %1429 = vmatprep.subr.bf16.mxu0 0
    %1430 = vmatpush1.bf16.msra.mxu0 0
    %1431 = vmatprep.subr.bf16.mxu0 0
    %1432 = vmatpush1.bf16.msra.mxu0 0
    %1433 = vmatprep.subr.bf16.mxu0 0
    %1434 = vmatpush1.bf16.msra.mxu0 0
    %1435 = vmatprep.subr.bf16.mxu0 0
    %1436 = vmatpush1.bf16.msra.mxu0 0
    %1437 = vmatprep.subr.bf16.mxu0 0
    %1438 = vmatpush1.bf16.msra.mxu0 0
    %1439 = vmatprep.subr.bf16.mxu0 0
    %1440 = vmatpush1.bf16.msra.mxu0 0
    %1441 = vmatprep.subr.bf16.mxu0 0
    %1442 = vmatpush1.bf16.msra.mxu0 0
    %1443 = vmatprep.subr.bf16.mxu0 0
    %1444 = vmatpush1.bf16.msra.mxu0 0
    %1445 = vmatprep.mubr.bf16.mxu0 0
    %1446 = vmatmul.mubr.bf16.gmra.mrb[0].mxu0 %v1411
    %v1447 = vpop.f32.mrb[0].mxu0
    %v1448 = vadd.f32 0.0, %v1447
    %v1449 = vpop.f32.mrb[0].mxu0
    %v1450 = vadd.f32 0.0, %v1449
    %v1451 = vpop.f32.mrb[0].mxu0
    %v1452 = vpop.f32.mrb[0].mxu0
    %1453 = vdwg.mxu0
    %v1454 = vadd.f32 %v1399, %v1448
    %v1455 = vadd.f32 %v1450, %v76
    %v1457 = vrot.slane %v1455, 6
    %v1459 = vsel %vm295, %v1454, %v1457
    %v1460 = vmul.f32 %v1459, 0.5
    %v1461 = vtanh.pop %v1460
    %v1462 = vmul.f32 %v1461, 0.5
    %v1463 = vadd.f32 %v1462, 0.5
    %v1464 = vtanh.pop %v1459
    %v1465 = vmul.f32 %v1463, %v1392
    %1467 = vrot.lane.b32.xlu0 %v1464, 64
    %v1468 = vpop.permute.xlu0 %1467
    %v1470 = vmul.f32 %v1463, %v1468
    %1472 = vrot.lane.b32.xlu0 %v1470, 32
    %v1473 = vpop.permute.xlu0 %1472
    %v1475 = vadd.f32 %v1465, %v1473
    %v1476 = vtanh.pop %v1475
    %1478 = vrot.lane.b32.xlu0 %v1476, 64
    %v1479 = vpop.permute.xlu0 %1478
    %v1481 = vmul.f32 %v1463, %v1479
    %1483 = vrot.lane.b32.xlu0 %v1481, 32
    %v1484 = vpop.permute.xlu0 %1483
    %v1486 = vrot.slane %v1481, 2
    %1487 = vrot.lane.b32.xlu0 %v1486, 64
    %v1488 = vpop.permute.xlu0 %1487
    %v1490 = vsel %vm115, %v1484, %v1488
    %v1491 = vpack.c.bf16 %v1490, %v1490
    %v1493 = vsel %vm245, %v1491, 0
    %1495 = vmatprep.subr.bf16.mxu0 %v230
    %1496 = vmatpush1.bf16.msra.mxu0 %v229
    %1497 = vmatprep.subr.bf16.mxu0 %v232
    %1498 = vmatpush1.bf16.msra.mxu0 %v231
    %1499 = vmatprep.subr.bf16.mxu0 %v234
    %1500 = vmatpush1.bf16.msra.mxu0 %v233
    %1501 = vmatprep.subr.bf16.mxu0 %v236
    %1502 = vmatpush1.bf16.msra.mxu0 %v235
    %1503 = vmatprep.subr.bf16.mxu0 0
    %1504 = vmatpush1.bf16.msra.mxu0 0
    %1505 = vmatprep.subr.bf16.mxu0 0
    %1506 = vmatpush1.bf16.msra.mxu0 0
    %1507 = vmatprep.subr.bf16.mxu0 0
    %1508 = vmatpush1.bf16.msra.mxu0 0
    %1509 = vmatprep.subr.bf16.mxu0 0
    %1510 = vmatpush1.bf16.msra.mxu0 0
    %1511 = vmatprep.subr.bf16.mxu0 0
    %1512 = vmatpush1.bf16.msra.mxu0 0
    %1513 = vmatprep.subr.bf16.mxu0 0
    %1514 = vmatpush1.bf16.msra.mxu0 0
    %1515 = vmatprep.subr.bf16.mxu0 0
    %1516 = vmatpush1.bf16.msra.mxu0 0
    %1517 = vmatprep.subr.bf16.mxu0 0
    %1518 = vmatpush1.bf16.msra.mxu0 0
    %1519 = vmatprep.subr.bf16.mxu0 0
    %1520 = vmatpush1.bf16.msra.mxu0 0
    %1521 = vmatprep.subr.bf16.mxu0 0
    %1522 = vmatpush1.bf16.msra.mxu0 0
    %1523 = vmatprep.subr.bf16.mxu0 0
    %1524 = vmatpush1.bf16.msra.mxu0 0
    %1525 = vmatprep.subr.bf16.mxu0 0
    %1526 = vmatpush1.bf16.msra.mxu0 0
    %1527 = vmatprep.mubr.bf16.mxu0 0
    %1528 = vmatmul.mubr.bf16.gmra.mrb[0].mxu0 %v1493
    %v1529 = vpop.f32.mrb[0].mxu0
    %v1530 = vadd.f32 0.0, %v1529
    %v1531 = vpop.f32.mrb[0].mxu0
    %v1532 = vadd.f32 0.0, %v1531
    %v1533 = vpop.f32.mrb[0].mxu0
    %v1534 = vpop.f32.mrb[0].mxu0
    %1535 = vdwg.mxu0
    %v1536 = vadd.f32 %v1530, 0.0
    %v1537 = vadd.f32 %v1532, %v76
    %v1539 = vrot.slane %v1537, 6
    %v1541 = vsel %vm295, %v1536, %v1539
    %v1542 = vmul.f32 %v1541, 0.5
    %v1543 = vtanh.pop %v1542
    %v1544 = vmul.f32 %v1543, 0.5
    %v1545 = vadd.f32 %v1544, 0.5
    %v1546 = vtanh.pop %v1541
    %v1547 = vmul.f32 %v1545, %v1475
    %1549 = vrot.lane.b32.xlu0 %v1546, 64
    %v1550 = vpop.permute.xlu0 %1549
    %v1552 = vmul.f32 %v1545, %v1550
    %1554 = vrot.lane.b32.xlu0 %v1552, 32
    %v1555 = vpop.permute.xlu0 %1554
    %v1557 = vadd.f32 %v1547, %v1555
    %v1558 = vtanh.pop %v1557
    %1560 = vrot.lane.b32.xlu0 %v1558, 64
    %v1561 = vpop.permute.xlu0 %1560
    %v1563 = vmul.f32 %v1545, %v1561
    %v1565 = vrot.slane %v1563, 2
    %v1567 = vadd.f32 %v1481, %v1565
    %v1568 = vmul.f32 %v1567, 0.5
    %1570 = vrot.lane.b32.xlu0 %v1568, 32
    %v1571 = vpop.permute.xlu0 %1570
    %vm1573 = vcmask 254976
    %1574 = vst.msk [vmem:[#allocation9] sm:$0x3] %vm1573, %v1571
    // Predicated region
    $region34: #{tpu_custom_call.1} parent=1 // pred_check
      _
    $region35: #{tpu_custom_call.1} parent=1 // pred_check_branch
      %1576 = sbr.rel (0) target = $region37
    $region36: #{tpu_custom_call.1} parent=1 // pred_region
      %s1578 = ssub.s32 32, 32
      %1579 = vsyncadd [#allocation5], %s1578
      %s1581 = sshll.u32 [#allocation9], 4
      %s1582 = int_to_ptr.vmem [resolvable:$true] %s1581
      %1584 = dma.vmem_to_hbm [thread:$0]  %s1582, 32, %s5, [#allocation5]
    $region37: #{tpu_custom_call.1} parent=1 // pred_fallthru
      _
    // Predicated region
    $region38: #{tpu_custom_call.1} parent=1 // pred_check
      _
    $region39: #{tpu_custom_call.1} parent=1 // pred_check_branch
      %1586 = sbr.rel (0) target = $region41
    $region40: #{tpu_custom_call.1} parent=1 // pred_region
      %1587 = dma.done [#allocation5], 32
    $region41: #{tpu_custom_call.1} parent=1 // pred_fallthru
      _
    %1588 = vsyncpa [#allocation4], 1
    %1589 = vsyncpa [#allocation7], 1
    %1590 = vsyncpa [#allocation5], 1

</llo_original>
